<compile_context>
chip_gen: v7x
topology: tpu7x:2x2x1
jax: 0.10.0
libtpu: 0.0.40
codegen_flags: <defaults>
</compile_context>

<pallas_src>
import jax
import jax.numpy as jnp
from jax.experimental import pallas as pl
from jax.experimental.pallas import tpu as pltpu


def _round_up(x, m):
    return (x + m - 1) // m * m


def _pick_tile_h(H, Wp, target_rows):
    """Largest divisor TH of H with TH*Wp <= target_rows and TH*Wp % 8 == 0.

    Falls back to the smallest 8-aligned divisor, then to the full extent
    (a block equal to the full dim is always a legal BlockSpec)."""
    ok = [th for th in range(1, H + 1) if H % th == 0 and (th * Wp) % 8 == 0]
    fit = [th for th in ok if th * Wp <= target_rows]
    if fit:
        return max(fit)
    if ok:
        return min(ok)
    return H


def _make_conv_block_kernel(KH, KW, Wp, THW, Cp, ph, pw, act_func, shortcut):
    def kernel(x_ref, w_ref, idp_ref, b_ref, o_ref):
        # x_ref:   (1, L, Cin)        flattened zero-padded NHWC image (VMEM-resident per n)
        # w_ref:   (KH, KW, Cin, Cp)  BN-folded weights, Cout zero-padded to Cp (k*128 lanes)
        # idp_ref: (Cin, Cp)          identity projection (used only when shortcut)
        # b_ref:   (1, Cp)            BN-folded per-channel shift (f32)
        # o_ref:   (1, THW, Cp)       output tile; row r = (output row h)*Wp + padded col w
        base = pl.program_id(1) * THW          # flat start of this H-tile
        acc = jnp.zeros((THW, Cp), dtype=jnp.float32)
        for kh in range(KH):                   # static, unrolled at trace time
            for kw in range(KW):
                # Contiguous slice of the flat padded image: no strided relayout,
                # native-dtype MXU operands, f32 accumulation.
                patch = x_ref[0, pl.ds(base + kh * Wp + kw, THW), :]
                acc = acc + jnp.dot(patch, w_ref[kh, kw],
                                    preferred_element_type=jnp.float32)
        y = acc + b_ref[...]
        if act_func == "relu":
            y = jnp.maximum(y, 0.0)
        elif act_func == "relu6":
            y = jnp.clip(y, 0.0, 6.0)
        # act_func == "" -> no activation
        if shortcut:
            # Residual is added AFTER the activation (matches the PyTorch module).
            ident = x_ref[0, pl.ds(base + ph * Wp + pw, THW), :]
            y = y + jnp.dot(ident, idp_ref[...], preferred_element_type=jnp.float32)
        o_ref[0] = y.astype(o_ref.dtype)

    return kernel


def conv_block(x, weight, *, conv_bias=None, gamma=None, beta=None,
               running_mean=None, running_var=None, eps=1e-5,
               use_bn=True, act_func="relu", shortcut=False,
               stride=1, dilation=1, vmem_limit_bytes=None):
    """ConvBlock forward: act(bn(conv2d(x))) [+ x if shortcut].

    x: (N, Cin, H, W) NCHW (PyTorch layout); weight: (Cout, Cin, KH, KW).
    BatchNorm is applied in inference form (running statistics), folded into the conv.
    """
    if stride != 1 or dilation != 1:
        # TODO(synk): stride>1 / dilation>1 not implemented in the Pallas kernel.
        raise NotImplementedError("only stride=1, dilation=1 supported")
    if act_func not in ("", "relu", "relu6"):
        # TODO(synk): other activations from build_activation not implemented.
        raise NotImplementedError(f"act_func={act_func!r}")

    N, Cin, H, W = x.shape
    Cout, Cin_w, KH, KW = weight.shape
    assert Cin_w == Cin
    assert KH % 2 == 1 and KW % 2 == 1, "same padding requires odd kernel size"
    if shortcut:
        assert Cin == Cout, "shortcut requires in_channel == out_channel"

    ph, pw = KH // 2, KW // 2
    Wp = W + 2 * pw
    Hp = H + 2 * ph + 1          # one extra zero row so the last tap slice stays in bounds
    L = Hp * Wp
    Cp = _round_up(Cout, 128)    # lane-dense output stores

    # Fold BatchNorm (inference) and the optional conv bias into (scale, shift).
    f32 = jnp.float32
    if use_bn:
        scale = gamma.astype(f32) * jax.lax.rsqrt(running_var.astype(f32) + eps)
        shift = beta.astype(f32) - running_mean.astype(f32) * scale
    else:
        scale = jnp.ones((Cout,), f32)
        shift = jnp.zeros((Cout,), f32)
    if conv_bias is not None:
        shift = shift + conv_bias.astype(f32) * scale

    # (Cout, Cin, KH, KW) * scale  ->  (KH, KW, Cin, Cp), native dtype for the MXU.
    w_eff = (weight.astype(f32) * scale[:, None, None, None]).transpose(2, 3, 1, 0)
    w_eff = jnp.pad(w_eff, ((0, 0), (0, 0), (0, 0), (0, Cp - Cout))).astype(x.dtype)
    shift_p = jnp.pad(shift, (0, Cp - Cout)).reshape(1, Cp)            # stays f32
    if shortcut:
        id_proj = jnp.pad(jnp.eye(Cin, dtype=f32), ((0, 0), (0, Cp - Cin)))
    else:
        id_proj = jnp.zeros((Cin, Cp), f32)
    id_proj = id_proj.astype(x.dtype)

    # NCHW -> NHWC, zero 'same' padding, flatten spatial onto the padded-width grid.
    # TODO(synk): keep the surrounding model NHWC to drop this relayout round trip.
    x_nhwc = jnp.transpose(x, (0, 2, 3, 1))
    xp = jnp.pad(x_nhwc, ((0, 0), (ph, ph + 1), (pw, pw), (0, 0)))
    xflat = xp.reshape(N, L, Cin)

    # H-tile size: keep the f32 accumulator (TH*Wp, Cp) around ~128 KiB.
    target_rows = max(8, (128 * 1024) // (Cp * 4))
    TH = _pick_tile_h(H, Wp, target_rows)
    THW = TH * Wp
    n_h = H // TH

    kernel = _make_conv_block_kernel(KH, KW, Wp, THW, Cp, ph, pw, act_func, shortcut)

    cp_kwargs = dict(dimension_semantics=("parallel", "parallel"))
    if vmem_limit_bytes is not None:
        cp_kwargs["vmem_limit_bytes"] = vmem_limit_bytes

    out = pl.pallas_call(
        kernel,
        out_shape=jax.ShapeDtypeStruct((N, H * Wp, Cp), x.dtype),
        grid_spec=pltpu.PrefetchScalarGridSpec(
            num_scalar_prefetch=0,
            grid=(N, n_h),
            in_specs=[
                # Full padded image; index constant along the H-tile axis -> one DMA
                # per image, VMEM-resident across tiles.
                pl.BlockSpec((1, L, Cin), lambda n, i: (n, 0, 0)),
                # Weights / id-projection / shift: constant index -> stay resident.
                pl.BlockSpec((KH, KW, Cin, Cp), lambda n, i: (0, 0, 0, 0)),
                pl.BlockSpec((Cin, Cp), lambda n, i: (0, 0)),
                pl.BlockSpec((1, Cp), lambda n, i: (0, 0)),
            ],
            out_specs=pl.BlockSpec((1, THW, Cp), lambda n, i: (n, i, 0)),
        ),
        compiler_params=pltpu.CompilerParams(**cp_kwargs),
    )(xflat, w_eff, id_proj, shift_p)

    # (N, H*Wp, Cp): drop the Wp-W garbage columns and the Cp-Cout padded lanes,
    # then back to NCHW (single fused slice+transpose in XLA).
    y = out.reshape(N, H, Wp, Cp)[:, :, :W, :Cout]
    return jnp.transpose(y, (0, 3, 1, 2))


def _reference_conv_block(x, weight, gamma, beta, running_mean, running_var, eps,
                          act_func="relu", shortcut=False):
    """Pure-JAX reference: Conv2d(same, no bias) -> BN(inference) -> ReLU [+x]."""
    ph, pw = weight.shape[2] // 2, weight.shape[3] // 2
    y = jax.lax.conv_general_dilated(
        x.astype(jnp.float32), weight.astype(jnp.float32),
        window_strides=(1, 1),
        padding=((ph, ph), (pw, pw)),
        dimension_numbers=("NCHW", "OIHW", "NCHW"))
    scale = gamma.astype(jnp.float32) / jnp.sqrt(running_var.astype(jnp.float32) + eps)
    bias = beta.astype(jnp.float32) - running_mean.astype(jnp.float32) * scale
    y = y * scale[None, :, None, None] + bias[None, :, None, None]
    if act_func == "relu":
        y = jnp.maximum(y, 0.0)
    if shortcut:
        y = y + x.astype(jnp.float32)
    return y.astype(x.dtype)


if __name__ == "__main__":
    key = jax.random.PRNGKey(0)
    k1, k2, k3, k4, k5, k6 = jax.random.split(key, 6)

    N, Cin, H, W = 2, 4, 16, 16
    Cout, K = 8, 3

    x = jax.random.normal(k1, (N, Cin, H, W), dtype=jnp.float32)
    weight = jax.random.normal(k2, (Cout, Cin, K, K), dtype=jnp.float32) * 0.2
    gamma = 1.0 + 0.1 * jax.random.normal(k3, (Cout,), dtype=jnp.float32)
    beta = 0.1 * jax.random.normal(k4, (Cout,), dtype=jnp.float32)
    running_mean = 0.1 * jax.random.normal(k5, (Cout,), dtype=jnp.float32)
    running_var = jnp.abs(jax.random.normal(k6, (Cout,), dtype=jnp.float32)) + 0.5
    eps = 1e-5

    y = conv_block(x, weight, gamma=gamma, beta=beta,
                   running_mean=running_mean, running_var=running_var, eps=eps,
                   use_bn=True, act_func="relu", shortcut=False)
    jax.block_until_ready(y)

    ref = _reference_conv_block(x, weight, gamma, beta, running_mean, running_var, eps)

    assert y.shape == (N, Cout, H, W) and y.dtype == x.dtype
    # Loose-ish tolerance: f32 operands at default matmul precision may use bf16
    # MXU passes; structural bugs (padding / tap offsets / channel mapping / BN
    # fold) would show up as O(1) errors.
    err = float(jnp.max(jnp.abs(y - ref)))
    assert err < 5e-2, f"max abs err {err}"
    print("KERNEL_OK")
</pallas_src>

<mosaic_0001>
module attributes {stable_mosaic.version = 11 : i64} {
  func.func @kernel(%arg0: i32, %arg1: i32, %arg2: memref<1x342x4xf32, #tpu.memory_space<vmem>>, %arg3: memref<3x3x4x128xf32, #tpu.memory_space<vmem>>, %arg4: memref<4x128xf32, #tpu.memory_space<vmem>>, %arg5: memref<1x128xf32, #tpu.memory_space<vmem>>, %arg6: memref<1x144x128xf32, #tpu.memory_space<vmem>>) attributes {dimension_semantics = [#tpu.dimension_semantics<parallel>, #tpu.dimension_semantics<parallel>], iteration_bounds = array<i64: 2, 2>, scalar_prefetch = 0 : i64, scratch_operands = 0 : i64, tpu.core_type = #tpu.core_type<tc>, window_params = [{transform_indices = @transform_0, window_bounds = array<i64: 1, 342, 4>}, {pipeline_mode = #tpu.pipeline_mode<synchronous>, transform_indices = @transform_1, window_bounds = array<i64: 3, 3, 4, 128>}, {pipeline_mode = #tpu.pipeline_mode<synchronous>, transform_indices = @transform_2, window_bounds = array<i64: 4, 128>}, {pipeline_mode = #tpu.pipeline_mode<synchronous>, transform_indices = @transform_3, window_bounds = array<i64: 1, 128>}, {transform_indices = @transform_4, window_bounds = array<i64: 1, 144, 128>}]} {
    %c144_i32 = arith.constant 144 : i32
    %0 = arith.muli %arg1, %c144_i32 : i32
    %cst = arith.constant 0.000000e+00 : f32
    %1 = vector.broadcast %cst : f32 to vector<144x128xf32>
    %c0_i32 = arith.constant 0 : i32
    %2 = arith.addi %0, %c0_i32 : i32
    %c0_i32_0 = arith.constant 0 : i32
    %3 = arith.addi %2, %c0_i32_0 : i32
    %c0 = arith.constant 0 : index
    %4 = arith.index_cast %3 : i32 to index
    %c0_1 = arith.constant 0 : index
    %5 = vector.load %arg2[%c0, %4, %c0_1] : memref<1x342x4xf32, #tpu.memory_space<vmem>>, vector<1x144x4xf32>
    %6 = vector.shape_cast %5 : vector<1x144x4xf32> to vector<144x4xf32>
    %c0_2 = arith.constant 0 : index
    %c0_3 = arith.constant 0 : index
    %c0_4 = arith.constant 0 : index
    %c0_5 = arith.constant 0 : index
    %7 = vector.load %arg3[%c0_2, %c0_3, %c0_4, %c0_5] : memref<3x3x4x128xf32, #tpu.memory_space<vmem>>, vector<1x1x4x128xf32>
    %8 = vector.shape_cast %7 : vector<1x1x4x128xf32> to vector<4x128xf32>
    %cst_6 = arith.constant dense<0.000000e+00> : vector<144x128xf32>
    %9 = tpu.matmul %6, %8, %cst_6 {dimension_numbers = #tpu.dot_dimension_numbers<[1], [0], [0], [1], [0, 0, 1, 1], [], []>} : vector<144x4xf32>, vector<4x128xf32>, vector<144x128xf32> -> vector<144x128xf32>
    %10 = arith.addf %1, %9 : vector<144x128xf32>
    %c0_i32_7 = arith.constant 0 : i32
    %11 = arith.addi %0, %c0_i32_7 : i32
    %c1_i32 = arith.constant 1 : i32
    %12 = arith.addi %11, %c1_i32 : i32
    %c0_8 = arith.constant 0 : index
    %13 = arith.index_cast %12 : i32 to index
    %c0_9 = arith.constant 0 : index
    %14 = vector.load %arg2[%c0_8, %13, %c0_9] : memref<1x342x4xf32, #tpu.memory_space<vmem>>, vector<1x144x4xf32>
    %15 = vector.shape_cast %14 : vector<1x144x4xf32> to vector<144x4xf32>
    %c0_10 = arith.constant 0 : index
    %c1 = arith.constant 1 : index
    %c0_11 = arith.constant 0 : index
    %c0_12 = arith.constant 0 : index
    %16 = vector.load %arg3[%c0_10, %c1, %c0_11, %c0_12] : memref<3x3x4x128xf32, #tpu.memory_space<vmem>>, vector<1x1x4x128xf32>
    %17 = vector.shape_cast %16 : vector<1x1x4x128xf32> to vector<4x128xf32>
    %cst_13 = arith.constant dense<0.000000e+00> : vector<144x128xf32>
    %18 = tpu.matmul %15, %17, %cst_13 {dimension_numbers = #tpu.dot_dimension_numbers<[1], [0], [0], [1], [0, 0, 1, 1], [], []>} : vector<144x4xf32>, vector<4x128xf32>, vector<144x128xf32> -> vector<144x128xf32>
    %19 = arith.addf %10, %18 : vector<144x128xf32>
    %c0_i32_14 = arith.constant 0 : i32
    %20 = arith.addi %0, %c0_i32_14 : i32
    %c2_i32 = arith.constant 2 : i32
    %21 = arith.addi %20, %c2_i32 : i32
    %c0_15 = arith.constant 0 : index
    %22 = arith.index_cast %21 : i32 to index
    %c0_16 = arith.constant 0 : index
    %23 = vector.load %arg2[%c0_15, %22, %c0_16] : memref<1x342x4xf32, #tpu.memory_space<vmem>>, vector<1x144x4xf32>
    %24 = vector.shape_cast %23 : vector<1x144x4xf32> to vector<144x4xf32>
    %c0_17 = arith.constant 0 : index
    %c2 = arith.constant 2 : index
    %c0_18 = arith.constant 0 : index
    %c0_19 = arith.constant 0 : index
    %25 = vector.load %arg3[%c0_17, %c2, %c0_18, %c0_19] : memref<3x3x4x128xf32, #tpu.memory_space<vmem>>, vector<1x1x4x128xf32>
    %26 = vector.shape_cast %25 : vector<1x1x4x128xf32> to vector<4x128xf32>
    %cst_20 = arith.constant dense<0.000000e+00> : vector<144x128xf32>
    %27 = tpu.matmul %24, %26, %cst_20 {dimension_numbers = #tpu.dot_dimension_numbers<[1], [0], [0], [1], [0, 0, 1, 1], [], []>} : vector<144x4xf32>, vector<4x128xf32>, vector<144x128xf32> -> vector<144x128xf32>
    %28 = arith.addf %19, %27 : vector<144x128xf32>
    %c18_i32 = arith.constant 18 : i32
    %29 = arith.addi %0, %c18_i32 : i32
    %c0_i32_21 = arith.constant 0 : i32
    %30 = arith.addi %29, %c0_i32_21 : i32
    %c0_22 = arith.constant 0 : index
    %31 = arith.index_cast %30 : i32 to index
    %c0_23 = arith.constant 0 : index
    %32 = vector.load %arg2[%c0_22, %31, %c0_23] : memref<1x342x4xf32, #tpu.memory_space<vmem>>, vector<1x144x4xf32>
    %33 = vector.shape_cast %32 : vector<1x144x4xf32> to vector<144x4xf32>
    %c1_24 = arith.constant 1 : index
    %c0_25 = arith.constant 0 : index
    %c0_26 = arith.constant 0 : index
    %c0_27 = arith.constant 0 : index
    %34 = vector.load %arg3[%c1_24, %c0_25, %c0_26, %c0_27] : memref<3x3x4x128xf32, #tpu.memory_space<vmem>>, vector<1x1x4x128xf32>
    %35 = vector.shape_cast %34 : vector<1x1x4x128xf32> to vector<4x128xf32>
    %cst_28 = arith.constant dense<0.000000e+00> : vector<144x128xf32>
    %36 = tpu.matmul %33, %35, %cst_28 {dimension_numbers = #tpu.dot_dimension_numbers<[1], [0], [0], [1], [0, 0, 1, 1], [], []>} : vector<144x4xf32>, vector<4x128xf32>, vector<144x128xf32> -> vector<144x128xf32>
    %37 = arith.addf %28, %36 : vector<144x128xf32>
    %c18_i32_29 = arith.constant 18 : i32
    %38 = arith.addi %0, %c18_i32_29 : i32
    %c1_i32_30 = arith.constant 1 : i32
    %39 = arith.addi %38, %c1_i32_30 : i32
    %c0_31 = arith.constant 0 : index
    %40 = arith.index_cast %39 : i32 to index
    %c0_32 = arith.constant 0 : index
    %41 = vector.load %arg2[%c0_31, %40, %c0_32] : memref<1x342x4xf32, #tpu.memory_space<vmem>>, vector<1x144x4xf32>
    %42 = vector.shape_cast %41 : vector<1x144x4xf32> to vector<144x4xf32>
    %c1_33 = arith.constant 1 : index
    %c1_34 = arith.constant 1 : index
    %c0_35 = arith.constant 0 : index
    %c0_36 = arith.constant 0 : index
    %43 = vector.load %arg3[%c1_33, %c1_34, %c0_35, %c0_36] : memref<3x3x4x128xf32, #tpu.memory_space<vmem>>, vector<1x1x4x128xf32>
    %44 = vector.shape_cast %43 : vector<1x1x4x128xf32> to vector<4x128xf32>
    %cst_37 = arith.constant dense<0.000000e+00> : vector<144x128xf32>
    %45 = tpu.matmul %42, %44, %cst_37 {dimension_numbers = #tpu.dot_dimension_numbers<[1], [0], [0], [1], [0, 0, 1, 1], [], []>} : vector<144x4xf32>, vector<4x128xf32>, vector<144x128xf32> -> vector<144x128xf32>
    %46 = arith.addf %37, %45 : vector<144x128xf32>
    %c18_i32_38 = arith.constant 18 : i32
    %47 = arith.addi %0, %c18_i32_38 : i32
    %c2_i32_39 = arith.constant 2 : i32
    %48 = arith.addi %47, %c2_i32_39 : i32
    %c0_40 = arith.constant 0 : index
    %49 = arith.index_cast %48 : i32 to index
    %c0_41 = arith.constant 0 : index
    %50 = vector.load %arg2[%c0_40, %49, %c0_41] : memref<1x342x4xf32, #tpu.memory_space<vmem>>, vector<1x144x4xf32>
    %51 = vector.shape_cast %50 : vector<1x144x4xf32> to vector<144x4xf32>
    %c1_42 = arith.constant 1 : index
    %c2_43 = arith.constant 2 : index
    %c0_44 = arith.constant 0 : index
    %c0_45 = arith.constant 0 : index
    %52 = vector.load %arg3[%c1_42, %c2_43, %c0_44, %c0_45] : memref<3x3x4x128xf32, #tpu.memory_space<vmem>>, vector<1x1x4x128xf32>
    %53 = vector.shape_cast %52 : vector<1x1x4x128xf32> to vector<4x128xf32>
    %cst_46 = arith.constant dense<0.000000e+00> : vector<144x128xf32>
    %54 = tpu.matmul %51, %53, %cst_46 {dimension_numbers = #tpu.dot_dimension_numbers<[1], [0], [0], [1], [0, 0, 1, 1], [], []>} : vector<144x4xf32>, vector<4x128xf32>, vector<144x128xf32> -> vector<144x128xf32>
    %55 = arith.addf %46, %54 : vector<144x128xf32>
    %c36_i32 = arith.constant 36 : i32
    %56 = arith.addi %0, %c36_i32 : i32
    %c0_i32_47 = arith.constant 0 : i32
    %57 = arith.addi %56, %c0_i32_47 : i32
    %c0_48 = arith.constant 0 : index
    %58 = arith.index_cast %57 : i32 to index
    %c0_49 = arith.constant 0 : index
    %59 = vector.load %arg2[%c0_48, %58, %c0_49] : memref<1x342x4xf32, #tpu.memory_space<vmem>>, vector<1x144x4xf32>
    %60 = vector.shape_cast %59 : vector<1x144x4xf32> to vector<144x4xf32>
    %c2_50 = arith.constant 2 : index
    %c0_51 = arith.constant 0 : index
    %c0_52 = arith.constant 0 : index
    %c0_53 = arith.constant 0 : index
    %61 = vector.load %arg3[%c2_50, %c0_51, %c0_52, %c0_53] : memref<3x3x4x128xf32, #tpu.memory_space<vmem>>, vector<1x1x4x128xf32>
    %62 = vector.shape_cast %61 : vector<1x1x4x128xf32> to vector<4x128xf32>
    %cst_54 = arith.constant dense<0.000000e+00> : vector<144x128xf32>
    %63 = tpu.matmul %60, %62, %cst_54 {dimension_numbers = #tpu.dot_dimension_numbers<[1], [0], [0], [1], [0, 0, 1, 1], [], []>} : vector<144x4xf32>, vector<4x128xf32>, vector<144x128xf32> -> vector<144x128xf32>
    %64 = arith.addf %55, %63 : vector<144x128xf32>
    %c36_i32_55 = arith.constant 36 : i32
    %65 = arith.addi %0, %c36_i32_55 : i32
    %c1_i32_56 = arith.constant 1 : i32
    %66 = arith.addi %65, %c1_i32_56 : i32
    %c0_57 = arith.constant 0 : index
    %67 = arith.index_cast %66 : i32 to index
    %c0_58 = arith.constant 0 : index
    %68 = vector.load %arg2[%c0_57, %67, %c0_58] : memref<1x342x4xf32, #tpu.memory_space<vmem>>, vector<1x144x4xf32>
    %69 = vector.shape_cast %68 : vector<1x144x4xf32> to vector<144x4xf32>
    %c2_59 = arith.constant 2 : index
    %c1_60 = arith.constant 1 : index
    %c0_61 = arith.constant 0 : index
    %c0_62 = arith.constant 0 : index
    %70 = vector.load %arg3[%c2_59, %c1_60, %c0_61, %c0_62] : memref<3x3x4x128xf32, #tpu.memory_space<vmem>>, vector<1x1x4x128xf32>
    %71 = vector.shape_cast %70 : vector<1x1x4x128xf32> to vector<4x128xf32>
    %cst_63 = arith.constant dense<0.000000e+00> : vector<144x128xf32>
    %72 = tpu.matmul %69, %71, %cst_63 {dimension_numbers = #tpu.dot_dimension_numbers<[1], [0], [0], [1], [0, 0, 1, 1], [], []>} : vector<144x4xf32>, vector<4x128xf32>, vector<144x128xf32> -> vector<144x128xf32>
    %73 = arith.addf %64, %72 : vector<144x128xf32>
    %c36_i32_64 = arith.constant 36 : i32
    %74 = arith.addi %0, %c36_i32_64 : i32
    %c2_i32_65 = arith.constant 2 : i32
    %75 = arith.addi %74, %c2_i32_65 : i32
    %c0_66 = arith.constant 0 : index
    %76 = arith.index_cast %75 : i32 to index
    %c0_67 = arith.constant 0 : index
    %77 = vector.load %arg2[%c0_66, %76, %c0_67] : memref<1x342x4xf32, #tpu.memory_space<vmem>>, vector<1x144x4xf32>
    %78 = vector.shape_cast %77 : vector<1x144x4xf32> to vector<144x4xf32>
    %c2_68 = arith.constant 2 : index
    %c2_69 = arith.constant 2 : index
    %c0_70 = arith.constant 0 : index
    %c0_71 = arith.constant 0 : index
    %79 = vector.load %arg3[%c2_68, %c2_69, %c0_70, %c0_71] : memref<3x3x4x128xf32, #tpu.memory_space<vmem>>, vector<1x1x4x128xf32>
    %80 = vector.shape_cast %79 : vector<1x1x4x128xf32> to vector<4x128xf32>
    %cst_72 = arith.constant dense<0.000000e+00> : vector<144x128xf32>
    %81 = tpu.matmul %78, %80, %cst_72 {dimension_numbers = #tpu.dot_dimension_numbers<[1], [0], [0], [1], [0, 0, 1, 1], [], []>} : vector<144x4xf32>, vector<4x128xf32>, vector<144x128xf32> -> vector<144x128xf32>
    %82 = arith.addf %73, %81 : vector<144x128xf32>
    %c0_73 = arith.constant 0 : index
    %c0_74 = arith.constant 0 : index
    %83 = vector.load %arg5[%c0_73, %c0_74] : memref<1x128xf32, #tpu.memory_space<vmem>>, vector<1x128xf32>
    %84 = vector.broadcast %83 : vector<1x128xf32> to vector<144x128xf32>
    %85 = arith.addf %82, %84 : vector<144x128xf32>
    %cst_75 = arith.constant 0.000000e+00 : f32
    %86 = vector.broadcast %cst_75 : f32 to vector<144x128xf32>
    %87 = arith.maximumf %85, %86 : vector<144x128xf32>
    %c0_76 = arith.constant 0 : index
    %c0_77 = arith.constant 0 : index
    %c0_78 = arith.constant 0 : index
    %88 = vector.load %arg6[%c0_76, %c0_77, %c0_78] : memref<1x144x128xf32, #tpu.memory_space<vmem>>, vector<1x144x128xf32>
    %89 = vector.shape_cast %88 : vector<1x144x128xf32> to vector<144x128xf32>
    %90 = vector.shape_cast %87 : vector<144x128xf32> to vector<1x144x128xf32>
    tpu.vector_store %arg6[%c0_76, %c0_77, %c0_78], %90 {strides = array<i32>} : memref<1x144x128xf32, #tpu.memory_space<vmem>>, vector<1x144x128xf32>,
    return
  }
  func.func @transform_0(%arg0: i32, %arg1: i32) -> (i32, i32, i32) {
    %c0_i32 = arith.constant 0 : i32
    %c0_i32_0 = arith.constant 0 : i32
    %c0_i32_1 = arith.constant 0 : i32
    return %arg0, %c0_i32, %c0_i32_0 : i32, i32, i32
  }
  func.func @transform_1(%arg0: i32, %arg1: i32) -> (i32, i32, i32, i32) {
    %c0_i32 = arith.constant 0 : i32
    %c0_i32_0 = arith.constant 0 : i32
    %c0_i32_1 = arith.constant 0 : i32
    %c0_i32_2 = arith.constant 0 : i32
    %c0_i32_3 = arith.constant 0 : i32
    return %c0_i32, %c0_i32_0, %c0_i32_1, %c0_i32_2 : i32, i32, i32, i32
  }
  func.func @transform_2(%arg0: i32, %arg1: i32) -> (i32, i32) {
    %c0_i32 = arith.constant 0 : i32
    %c0_i32_0 = arith.constant 0 : i32
    %c0_i32_1 = arith.constant 0 : i32
    return %c0_i32, %c0_i32_0 : i32, i32
  }
  func.func @transform_3(%arg0: i32, %arg1: i32) -> (i32, i32) {
    %c0_i32 = arith.constant 0 : i32
    %c0_i32_0 = arith.constant 0 : i32
    %c0_i32_1 = arith.constant 0 : i32
    return %c0_i32, %c0_i32_0 : i32, i32
  }
  func.func @transform_4(%arg0: i32, %arg1: i32) -> (i32, i32, i32) {
    %c0_i32 = arith.constant 0 : i32
    %c0_i32_0 = arith.constant 0 : i32
    return %arg0, %arg1, %c0_i32 : i32, i32, i32
  }
}

</mosaic_0001>

<llo_original>
// kernel: tpu_custom_call.1
$region0: #{tpu_custom_call.1}
  #allocation0 [shape = 'u32[]', space=smem, size = 0x4, offset = 0x4, fixed_abs, tag = 'smem constant byte address 0x4 - core index']
  #allocation1 [shape = 'u32[144,128]{1,0:T(1,128)}', space=vmem, size = 0x12000, scoped, tag = 'internal scratch']
  %s0 = inlined_call_operand.vmem [shape: f32[2,342,4], index: 0, kind: input, shape index: {}]
  %s1 = inlined_call_operand.vmem [shape: f32[3,3,4,128], index: 1, kind: input, shape index: {}]
  %s2 = inlined_call_operand.vmem [shape: f32[4,128], index: 2, kind: input, shape index: {}]
  %s3 = inlined_call_operand.vmem [shape: f32[1,128], index: 3, kind: input, shape index: {}]
  %s4 = inlined_call_operand.hbm [shape: f32[2,288,128], index: 4, kind: output, shape index: {}]
  %s5 = sld [smem:[#allocation0]]
  $region49: #{tpu_custom_call.1} parent=0
    _
  %s7 = ssub.s32 1, %s5
  %s8 = scalar_select 0, %s7, %s5
  $region1: #{tpu_custom_call.1} parent=0
    #allocation2 [shape = 'u8[147456]{0}', space=vmem, size = 0x24000, scoped, tag = 'output window, operand 0']
    #allocation3 [shape = 's32[2]{0}', space=sflag, size = 0x8, scoped, tag = 'scoped memory for tpu_custom_call.1']
    %9 = vsyncpa [#allocation3], 0
    %s10 = scalar_lea.sflag [#allocation3], 1
    %11 = vsyncpa %s10, 0
    loop: start=0, step=1, limit=6
    $region2: #{tpu_custom_call.1} parent=1 // loop_pre_header
      _
    $region3: #{tpu_custom_call.1} parent=1 // loop_header
      %s13 = sphi 0, %s17
      %p14 = scmp.ge.s32.totalorder %s13, 6
      %s20 = sphi 0, %s32
      %s21 = sphi 0, %s28
      %s22 = sphi 0, %s20
      %s23 = sphi 0, %s21
      %s24 = sphi 0, %s22
      %s25 = sphi 0, %s23
      %s35 = sphi 0, %s37
      %s38 = sphi 0, %s35
      %s39 = sphi 0, %s38
      %s55 = sphi 0, %s39
      %s59 = sphi 0, %s59
      %s61 = sphi 0, %s59
      %s62 = sphi 0, %s61
      %s76 = sphi 0, %s62
      %s80 = sphi 0, %s80
      %s82 = sphi 0, %s80
      %s83 = sphi 0, %s82
      %s97 = sphi 0, %s83
      %s101 = sphi 0, %s101
      %s103 = sphi 0, %s101
      %s104 = sphi 0, %s103
      %s118 = sphi 0, %s104
      %s126 = sphi 0, %s128
      %s129 = sphi 0, %s126
      %s130 = sphi 0, %s129
      %s146 = sphi 0, %s130
    $region4: #{tpu_custom_call.1} parent=1 // loop_header_branch
      %16 = sbr.rel (%p14) target = $region8
    $region5: #{tpu_custom_call.1} parent=1 // loop_body
      %s18 = ssub.s32 %s13, 1
      %s19 = ssub.s32 %s13, 2
      %s26 = sadd.s32 1, %s21
      %p27 = scmp.ge.s32.totalorder %s26, 2
      %s28 = scalar_select %p27, 0, %s26
      %s29 = sadd.s32 1, %s20
      %s30 = scalar_select %p27, %s29, %s20
      %p31 = scmp.ge.s32.totalorder %s30, 2
      %s32 = scalar_select %p31, 0, %s30
      %s33 = ssub.s32 %s20, %s32
      %p34 = scmp.eq.s32.totalorder %s33, 0
      %s36 = sadd.s32 %s35, 1
      %s37 = scalar_select %p34, %s35, %s36
      %p40 = pneg %p34
      %p41 = scmp.eq.s32.totalorder %s13, 3
      %p42 = por %p40, %p41
      %p43 = scmp.ne.s32.totalorder %s35, %s38
      %p44 = scmp.eq.s32.totalorder %s13, 0
      %p45 = por %p43, %p44
      %p46 = scmp.ne.s32.totalorder %s35, %s38
      %p47 = scmp.eq.s32.totalorder %s18, 3
      %p48 = por %p46, %p47
      %p49 = scmp.ne.s32.totalorder %s38, %s39
      %p50 = scmp.eq.s32.totalorder %s18, 0
      %p51 = por %p49, %p50
      %p52 = scmp.ne.s32.totalorder %s38, %s39
      %p53 = scmp.eq.s32.totalorder %s19, 3
      %p54 = por %p52, %p53
      %p56 = scmp.ne.s32.totalorder %s39, %s55
      %p57 = scmp.eq.s32.totalorder %s19, 0
      %p58 = por %p56, %p57
      %s60 = sadd.s32 %s59, 1
      %p63 = scmp.eq.s32.totalorder %s13, 3
      %p64 = scmp.ne.s32.totalorder %s59, %s61
      %p65 = scmp.eq.s32.totalorder %s13, 0
      %p66 = por %p64, %p65
      %p67 = scmp.ne.s32.totalorder %s59, %s61
      %p68 = scmp.eq.s32.totalorder %s18, 3
      %p69 = por %p67, %p68
      %p70 = scmp.ne.s32.totalorder %s61, %s62
      %p71 = scmp.eq.s32.totalorder %s18, 0
      %p72 = por %p70, %p71
      %p73 = scmp.ne.s32.totalorder %s61, %s62
      %p74 = scmp.eq.s32.totalorder %s19, 3
      %p75 = por %p73, %p74
      %p77 = scmp.ne.s32.totalorder %s62, %s76
      %p78 = scmp.eq.s32.totalorder %s19, 0
      %p79 = por %p77, %p78
      %s81 = sadd.s32 %s80, 1
      %p84 = scmp.eq.s32.totalorder %s13, 3
      %p85 = scmp.ne.s32.totalorder %s80, %s82
      %p86 = scmp.eq.s32.totalorder %s13, 0
      %p87 = por %p85, %p86
      %p88 = scmp.ne.s32.totalorder %s80, %s82
      %p89 = scmp.eq.s32.totalorder %s18, 3
      %p90 = por %p88, %p89
      %p91 = scmp.ne.s32.totalorder %s82, %s83
      %p92 = scmp.eq.s32.totalorder %s18, 0
      %p93 = por %p91, %p92
      %p94 = scmp.ne.s32.totalorder %s82, %s83
      %p95 = scmp.eq.s32.totalorder %s19, 3
      %p96 = por %p94, %p95
      %p98 = scmp.ne.s32.totalorder %s83, %s97
      %p99 = scmp.eq.s32.totalorder %s19, 0
      %p100 = por %p98, %p99
      %s102 = sadd.s32 %s101, 1
      %p105 = scmp.eq.s32.totalorder %s13, 3
      %p106 = scmp.ne.s32.totalorder %s101, %s103
      %p107 = scmp.eq.s32.totalorder %s13, 0
      %p108 = por %p106, %p107
      %p109 = scmp.ne.s32.totalorder %s101, %s103
      %p110 = scmp.eq.s32.totalorder %s18, 3
      %p111 = por %p109, %p110
      %p112 = scmp.ne.s32.totalorder %s103, %s104
      %p113 = scmp.eq.s32.totalorder %s18, 0
      %p114 = por %p112, %p113
      %p115 = scmp.ne.s32.totalorder %s103, %s104
      %p116 = scmp.eq.s32.totalorder %s19, 3
      %p117 = por %p115, %p116
      %p119 = scmp.ne.s32.totalorder %s104, %s118
      %p120 = scmp.eq.s32.totalorder %s19, 0
      %p121 = por %p119, %p120
      %s122 = ssub.s32 %s20, %s32
      %s123 = ssub.s32 %s21, %s28
      %s124 = sor.u32 %s122, %s123
      %p125 = scmp.eq.s32.totalorder %s124, 0
      %s127 = sadd.s32 %s126, 1
      %s128 = scalar_select %p125, %s126, %s127
      %p131 = pneg %p125
      %p132 = scmp.eq.s32.totalorder %s13, 3
      %p133 = por %p131, %p132
      %p134 = scmp.ne.s32.totalorder %s126, %s129
      %p135 = scmp.eq.s32.totalorder %s13, 0
      %p136 = por %p134, %p135
      %p137 = scmp.ne.s32.totalorder %s126, %s129
      %p138 = scmp.eq.s32.totalorder %s18, 3
      %p139 = por %p137, %p138
      %p140 = scmp.ne.s32.totalorder %s129, %s130
      %p141 = scmp.eq.s32.totalorder %s18, 0
      %p142 = por %p140, %p141
      %p143 = scmp.ne.s32.totalorder %s129, %s130
      %p144 = scmp.eq.s32.totalorder %s19, 3
      %p145 = por %p143, %p144
      %p147 = scmp.ne.s32.totalorder %s130, %s146
      %p148 = scmp.eq.s32.totalorder %s19, 0
      %p149 = por %p147, %p148
      %p150 = scmp.le.s32.totalorder 1, %s13
      %p151 = scmp.lt.s32.totalorder %s13, 5
      %p152 = pnand %p150, %p151
      %p153 = pneg %p152
      // Predicated region
      $region9: #{tpu_custom_call.1} parent=5 // pred_check
        _
      $region10: #{tpu_custom_call.1} parent=5 // pred_check_branch
        %155 = sbr.rel (%p152) target = $region12
      $region11: #{tpu_custom_call.1} parent=5 // pred_region
        %s156 = ssub.s32 %s13, 1
        // Predicated region
        $region13: #{tpu_custom_call.1} parent=11 // pred_check
          %p157 = pneg %p72
        $region14: #{tpu_custom_call.1} parent=11 // pred_check_branch
          %159 = sbr.rel (%p157) target = $region16
        $region15: #{tpu_custom_call.1} parent=11 // pred_region
          _
        $region16: #{tpu_custom_call.1} parent=11 // pred_fallthru
          _
        // Predicated region
        $region17: #{tpu_custom_call.1} parent=11 // pred_check
          %p160 = pneg %p93
        $region18: #{tpu_custom_call.1} parent=11 // pred_check_branch
          %162 = sbr.rel (%p160) target = $region20
        $region19: #{tpu_custom_call.1} parent=11 // pred_region
          _
        $region20: #{tpu_custom_call.1} parent=11 // pred_fallthru
          _
        // Predicated region
        $region21: #{tpu_custom_call.1} parent=11 // pred_check
          %p163 = pneg %p114
        $region22: #{tpu_custom_call.1} parent=11 // pred_check_branch
          %165 = sbr.rel (%p163) target = $region24
        $region23: #{tpu_custom_call.1} parent=11 // pred_region
          _
        $region24: #{tpu_custom_call.1} parent=11 // pred_fallthru
          _
      $region12: #{tpu_custom_call.1} parent=5 // pred_fallthru
        _
      %p166 = scmp.lt.s32.totalorder %s13, 4
      // Predicated region
      $region25: #{tpu_custom_call.1} parent=5 // pred_check
        %p167 = pneg %p166
      $region26: #{tpu_custom_call.1} parent=5 // pred_check_branch
        %169 = sbr.rel (%p167) target = $region28
      $region27: #{tpu_custom_call.1} parent=5 // pred_region
        // Predicated region
        $region29: #{tpu_custom_call.1} parent=27 // pred_check
          %p170 = pneg %p45
        $region30: #{tpu_custom_call.1} parent=27 // pred_check_branch
          %172 = sbr.rel (%p170) target = $region32
        $region31: #{tpu_custom_call.1} parent=27 // pred_region
          %p173 = scmp.lt.s32.totalorder %s20, 1
          %s174 = scalar_select %p173, %s20, 1
          %s175 = smul.addr %s174, 43
          %s176 = smul.addr %s175, 8
          %s177 = scalar_lea.vmem %s0, %s176
        $region32: #{tpu_custom_call.1} parent=27 // pred_fallthru
          _
      $region28: #{tpu_custom_call.1} parent=5 // pred_fallthru
        _
      %p178 = scmp.le.s32.totalorder 1, %s13
      %p179 = scmp.lt.s32.totalorder %s13, 5
      %p180 = pnand %p178, %p179
      %p181 = pneg %p180
      // Predicated region
      $region33: #{tpu_custom_call.1} parent=5 // pred_check
        _
      $region34: #{tpu_custom_call.1} parent=5 // pred_check_branch
        %183 = sbr.rel (%p180) target = $region36
      $region35: #{tpu_custom_call.1} parent=5 // pred_region
        %s184 = ssub.s32 %s13, 1
        %p185 = scmp.lt.s32.totalorder %s22, 1
        %s186 = scalar_select %p185, %s22, 1
        %s187 = smul.addr %s186, 43
        %s188 = smul.addr %s187, 8
        %s189 = scalar_lea.vmem %s0, %s188
        %p190 = pneg %p51
        %p191 = pneg %p48
        %p192 = pneg %p72
        %p193 = pneg %p69
        %p194 = pneg %p93
        %p195 = pneg %p90
        %p196 = pneg %p114
        %p197 = pneg %p111
        %p198 = pneg %p142
        %p199 = pneg %p139
        %s200 = sand.u32 %s129, 1
        %s201 = scalar_lea.sflag [#allocation3], %s200
        %s202 = sand.u32 %s129, 1
        %s203 = smul.addr %s202, 144
        %s204 = scalar_lea.vmem [#allocation2], %s203
        %p205 = scmp.lt.s32.totalorder %s22, 1
        %s206 = scalar_select %p205, %s22, 1
        %s207 = smul.addr %s206, 43
        %s208 = smul.addr %s207, 8
        %s209 = scalar_lea.vmem %s0, %s208
        %s210 = smul.u32 18, %s23
        %s211 = smul.u32 %s23, 144
        %s212 = scalar_lea.vmem %s209, %s211
        %v213 = vld [vmem:[%s212] sm:$0xff]
        %v214 = vld [vmem:[%s212 + $0x8] sm:$0xff]
        %v215 = vld [vmem:[%s212 + $0x10] sm:$0xff]
        %v216 = vld [vmem:[%s212 + $0x18] sm:$0xff]
        %v217 = vld [vmem:[%s212 + $0x20] sm:$0xff]
        %v218 = vld [vmem:[%s212 + $0x28] sm:$0xff]
        %v219 = vld [vmem:[%s212 + $0x30] sm:$0xff]
        %v220 = vld [vmem:[%s212 + $0x38] sm:$0xff]
        %v221 = vld [vmem:[%s212 + $0x40] sm:$0xff]
        %v222 = vld [vmem:[%s212 + $0x48] sm:$0xff]
        %v223 = vld [vmem:[%s212 + $0x50] sm:$0xff]
        %v224 = vld [vmem:[%s212 + $0x58] sm:$0xff]
        %v225 = vld [vmem:[%s212 + $0x60] sm:$0xff]
        %v226 = vld [vmem:[%s212 + $0x68] sm:$0xff]
        %v227 = vld [vmem:[%s212 + $0x70] sm:$0xff]
        %v228 = vld [vmem:[%s212 + $0x78] sm:$0xff]
        %v229 = vld [vmem:[%s212 + $0x80] sm:$0xff]
        %v230 = vld [vmem:[%s212 + $0x88] sm:$0xff]
        %v231 = vld [vmem:[%s1] sm:$0xf]
        %s232 = sadd.s32 %s211, 1
        %s233 = scalar_lea.vmem %s209, %s232
        %v234 = vld [vmem:[%s233] sm:$0xff]
        %v235 = vld [vmem:[%s233 + $0x8] sm:$0xff]
        %v236 = vld [vmem:[%s233 + $0x10] sm:$0xff]
        %v237 = vld [vmem:[%s233 + $0x18] sm:$0xff]
        %v238 = vld [vmem:[%s233 + $0x20] sm:$0xff]
        %v239 = vld [vmem:[%s233 + $0x28] sm:$0xff]
        %v240 = vld [vmem:[%s233 + $0x30] sm:$0xff]
        %v241 = vld [vmem:[%s233 + $0x38] sm:$0xff]
        %v242 = vld [vmem:[%s233 + $0x40] sm:$0xff]
        %v243 = vld [vmem:[%s233 + $0x48] sm:$0xff]
        %v244 = vld [vmem:[%s233 + $0x50] sm:$0xff]
        %v245 = vld [vmem:[%s233 + $0x58] sm:$0xff]
        %v246 = vld [vmem:[%s233 + $0x60] sm:$0xff]
        %v247 = vld [vmem:[%s233 + $0x68] sm:$0xff]
        %v248 = vld [vmem:[%s233 + $0x70] sm:$0xff]
        %v249 = vld [vmem:[%s233 + $0x78] sm:$0xff]
        %v250 = vld [vmem:[%s233 + $0x80] sm:$0xff]
        %v251 = vld [vmem:[%s233 + $0x88] sm:$0xff]
        %s252 = scalar_lea.vmem %s1, 4
        %v253 = vld [vmem:[%s252] sm:$0xf]
        %vm254 = vcmask 31744
        %v256 = vsel %vm254, %v234, 0
        %v259 = vsel %vm254, %v235, 0
        %v262 = vsel %vm254, %v236, 0
        %v265 = vsel %vm254, %v237, 0
        %v268 = vsel %vm254, %v238, 0
        %v271 = vsel %vm254, %v239, 0
        %v274 = vsel %vm254, %v240, 0
        %v277 = vsel %vm254, %v241, 0
        %v280 = vsel %vm254, %v242, 0
        %v283 = vsel %vm254, %v243, 0
        %v286 = vsel %vm254, %v244, 0
        %v289 = vsel %vm254, %v245, 0
        %v292 = vsel %vm254, %v246, 0
        %v295 = vsel %vm254, %v247, 0
        %v298 = vsel %vm254, %v248, 0
        %v301 = vsel %vm254, %v249, 0
        %v304 = vsel %vm254, %v250, 0
        %v307 = vsel %vm254, %v251, 0
        %vm309 = vcmask 1043456
        %v311 = vsel %vm309, %v253, 0
        %313 = vmatprep.subr.mxu0 0.0
        %314 = vmatpush1.msra.mxu0 %v311
        %315 = vmatprep.subr.mxu0 0.0
        %316 = vmatpush1.msra.mxu0 0.0
        %317 = vmatprep.subr.mxu0 0.0
        %318 = vmatpush1.msra.mxu0 0.0
        %319 = vmatprep.subr.mxu0 0.0
        %320 = vmatpush1.msra.mxu0 0.0
        %321 = vmatprep.subr.mxu0 0.0
        %322 = vmatpush1.msra.mxu0 0.0
        %323 = vmatprep.subr.mxu0 0.0
        %324 = vmatpush1.msra.mxu0 0.0
        %325 = vmatprep.subr.mxu0 0.0
        %326 = vmatpush1.msra.mxu0 0.0
        %327 = vmatprep.subr.mxu0 0.0
        %328 = vmatpush1.msra.mxu0 0.0
        %329 = vmatprep.subr.mxu0 0.0
        %330 = vmatpush1.msra.mxu0 0.0
        %331 = vmatprep.subr.mxu0 0.0
        %332 = vmatpush1.msra.mxu0 0.0
        %333 = vmatprep.subr.mxu0 0.0
        %334 = vmatpush1.msra.mxu0 0.0
        %335 = vmatprep.subr.mxu0 0.0
        %336 = vmatpush1.msra.mxu0 0.0
        %337 = vmatprep.subr.mxu0 0.0
        %338 = vmatpush1.msra.mxu0 0.0
        %339 = vmatprep.subr.mxu0 0.0
        %340 = vmatpush1.msra.mxu0 0.0
        %341 = vmatprep.subr.mxu0 0.0
        %342 = vmatpush1.msra.mxu0 0.0
        %343 = vmatprep.subr.mxu0 0.0
        %344 = vmatpush1.msra.mxu0 0.0
        %345 = vmatprep.subr.mxu0 0.0
        %346 = vmatpush1.msra.mxu0 0.0
        %347 = vmatprep.subr.mxu0 0.0
        %348 = vmatpush1.msra.mxu0 0.0
        %349 = vmatprep.subr.mxu0 0.0
        %350 = vmatpush1.msra.mxu0 0.0
        %351 = vmatprep.subr.mxu0 0.0
        %352 = vmatpush1.msra.mxu0 0.0
        %353 = vmatprep.subr.mxu0 0.0
        %354 = vmatpush1.msra.mxu0 0.0
        %355 = vmatprep.subr.mxu0 0.0
        %356 = vmatpush1.msra.mxu0 0.0
        %357 = vmatprep.subr.mxu0 0.0
        %358 = vmatpush1.msra.mxu0 0.0
        %359 = vmatprep.subr.mxu0 0.0
        %360 = vmatpush1.msra.mxu0 0.0
        %361 = vmatprep.subr.mxu0 0.0
        %362 = vmatpush1.msra.mxu0 0.0
        %363 = vmatprep.subr.mxu0 0.0
        %364 = vmatpush1.msra.mxu0 0.0
        %365 = vmatprep.subr.mxu0 0.0
        %366 = vmatpush1.msra.mxu0 0.0
        %367 = vmatprep.subr.mxu0 0.0
        %368 = vmatpush1.msra.mxu0 0.0
        %369 = vmatprep.subr.mxu0 0.0
        %370 = vmatpush1.msra.mxu0 0.0
        %371 = vmatprep.subr.mxu0 0.0
        %372 = vmatpush1.msra.mxu0 0.0
        %373 = vmatprep.subr.mxu0 0.0
        %374 = vmatpush1.msra.mxu0 0.0
        %375 = vmatprep.subr.mxu0 0.0
        %376 = vmatpush1.msra.mxu0 0.0
        %377 = vmatprep.mubr.f32.mxu0 0.0
        %378 = vmatmul.mubr.f32.gmra.mrb[0].mxu0 %v256
        %v379 = vpop.f32.mrb[0].mxu0
        %v380 = vadd.f32 0.0, %v379
        %v381 = vpop.f32.mrb[0].mxu0
        %382 = vmatprep.mubr.f32.mxu0 0.0
        %383 = vmatmul.mubr.f32.gmra.mrb[0].mxu0 %v259
        %v384 = vpop.f32.mrb[0].mxu0
        %v385 = vadd.f32 0.0, %v384
        %v386 = vpop.f32.mrb[0].mxu0
        %387 = vmatprep.mubr.f32.mxu0 0.0
        %388 = vmatmul.mubr.f32.gmra.mrb[0].mxu0 %v262
        %v389 = vpop.f32.mrb[0].mxu0
        %v390 = vadd.f32 0.0, %v389
        %v391 = vpop.f32.mrb[0].mxu0
        %392 = vmatprep.mubr.f32.mxu0 0.0
        %393 = vmatmul.mubr.f32.gmra.mrb[0].mxu0 %v265
        %v394 = vpop.f32.mrb[0].mxu0
        %v395 = vadd.f32 0.0, %v394
        %v396 = vpop.f32.mrb[0].mxu0
        %397 = vmatprep.mubr.f32.mxu0 0.0
        %398 = vmatmul.mubr.f32.gmra.mrb[0].mxu0 %v268
        %v399 = vpop.f32.mrb[0].mxu0
        %v400 = vadd.f32 0.0, %v399
        %v401 = vpop.f32.mrb[0].mxu0
        %402 = vmatprep.mubr.f32.mxu0 0.0
        %403 = vmatmul.mubr.f32.gmra.mrb[0].mxu0 %v271
        %v404 = vpop.f32.mrb[0].mxu0
        %v405 = vadd.f32 0.0, %v404
        %v406 = vpop.f32.mrb[0].mxu0
        %407 = vmatprep.mubr.f32.mxu0 0.0
        %408 = vmatmul.mubr.f32.gmra.mrb[0].mxu0 %v274
        %v409 = vpop.f32.mrb[0].mxu0
        %v410 = vadd.f32 0.0, %v409
        %v411 = vpop.f32.mrb[0].mxu0
        %412 = vmatprep.mubr.f32.mxu0 0.0
        %413 = vmatmul.mubr.f32.gmra.mrb[0].mxu0 %v277
        %v414 = vpop.f32.mrb[0].mxu0
        %v415 = vadd.f32 0.0, %v414
        %v416 = vpop.f32.mrb[0].mxu0
        %417 = vmatprep.mubr.f32.mxu0 0.0
        %418 = vmatmul.mubr.f32.gmra.mrb[0].mxu0 %v280
        %v419 = vpop.f32.mrb[0].mxu0
        %v420 = vadd.f32 0.0, %v419
        %v421 = vpop.f32.mrb[0].mxu0
        %422 = vmatprep.mubr.f32.mxu0 0.0
        %423 = vmatmul.mubr.f32.gmra.mrb[0].mxu0 %v283
        %v424 = vpop.f32.mrb[0].mxu0
        %v425 = vadd.f32 0.0, %v424
        %v426 = vpop.f32.mrb[0].mxu0
        %427 = vmatprep.mubr.f32.mxu0 0.0
        %428 = vmatmul.mubr.f32.gmra.mrb[0].mxu0 %v286
        %v429 = vpop.f32.mrb[0].mxu0
        %v430 = vadd.f32 0.0, %v429
        %v431 = vpop.f32.mrb[0].mxu0
        %432 = vmatprep.mubr.f32.mxu0 0.0
        %433 = vmatmul.mubr.f32.gmra.mrb[0].mxu0 %v289
        %v434 = vpop.f32.mrb[0].mxu0
        %v435 = vadd.f32 0.0, %v434
        %v436 = vpop.f32.mrb[0].mxu0
        %437 = vmatprep.mubr.f32.mxu0 0.0
        %438 = vmatmul.mubr.f32.gmra.mrb[0].mxu0 %v292
        %v439 = vpop.f32.mrb[0].mxu0
        %v440 = vadd.f32 0.0, %v439
        %v441 = vpop.f32.mrb[0].mxu0
        %442 = vmatprep.mubr.f32.mxu0 0.0
        %443 = vmatmul.mubr.f32.gmra.mrb[0].mxu0 %v295
        %v444 = vpop.f32.mrb[0].mxu0
        %v445 = vadd.f32 0.0, %v444
        %v446 = vpop.f32.mrb[0].mxu0
        %447 = vmatprep.mubr.f32.mxu0 0.0
        %448 = vmatmul.mubr.f32.gmra.mrb[0].mxu0 %v298
        %v449 = vpop.f32.mrb[0].mxu0
        %v450 = vadd.f32 0.0, %v449
        %v451 = vpop.f32.mrb[0].mxu0
        %452 = vmatprep.mubr.f32.mxu0 0.0
        %453 = vmatmul.mubr.f32.gmra.mrb[0].mxu0 %v301
        %v454 = vpop.f32.mrb[0].mxu0
        %v455 = vadd.f32 0.0, %v454
        %v456 = vpop.f32.mrb[0].mxu0
        %457 = vmatprep.mubr.f32.mxu0 0.0
        %458 = vmatmul.mubr.f32.gmra.mrb[0].mxu0 %v304
        %v459 = vpop.f32.mrb[0].mxu0
        %v460 = vadd.f32 0.0, %v459
        %v461 = vpop.f32.mrb[0].mxu0
        %462 = vmatprep.mubr.f32.mxu0 0.0
        %463 = vmatmul.mubr.f32.gmra.mrb[0].mxu0 %v307
        %v464 = vpop.f32.mrb[0].mxu0
        %v465 = vadd.f32 0.0, %v464
        %v466 = vpop.f32.mrb[0].mxu0
        %467 = vdwg.mxu0
        %v469 = vsel %vm254, %v213, 0
        %v472 = vsel %vm254, %v214, 0
        %v475 = vsel %vm254, %v215, 0
        %v478 = vsel %vm254, %v216, 0
        %v481 = vsel %vm254, %v217, 0
        %v484 = vsel %vm254, %v218, 0
        %v487 = vsel %vm254, %v219, 0
        %v490 = vsel %vm254, %v220, 0
        %v493 = vsel %vm254, %v221, 0
        %v496 = vsel %vm254, %v222, 0
        %v499 = vsel %vm254, %v223, 0
        %v502 = vsel %vm254, %v224, 0
        %v505 = vsel %vm254, %v225, 0
        %v508 = vsel %vm254, %v226, 0
        %v511 = vsel %vm254, %v227, 0
        %v514 = vsel %vm254, %v228, 0
        %v517 = vsel %vm254, %v229, 0
        %v520 = vsel %vm254, %v230, 0
        %v523 = vsel %vm309, %v231, 0
        %525 = vmatprep.subr.mxu0 0.0
        %526 = vmatpush1.msra.mxu0 %v523
        %527 = vmatprep.subr.mxu0 0.0
        %528 = vmatpush1.msra.mxu0 0.0
        %529 = vmatprep.subr.mxu0 0.0
        %530 = vmatpush1.msra.mxu0 0.0
        %531 = vmatprep.subr.mxu0 0.0
        %532 = vmatpush1.msra.mxu0 0.0
        %533 = vmatprep.subr.mxu0 0.0
        %534 = vmatpush1.msra.mxu0 0.0
        %535 = vmatprep.subr.mxu0 0.0
        %536 = vmatpush1.msra.mxu0 0.0
        %537 = vmatprep.subr.mxu0 0.0
        %538 = vmatpush1.msra.mxu0 0.0
        %539 = vmatprep.subr.mxu0 0.0
        %540 = vmatpush1.msra.mxu0 0.0
        %541 = vmatprep.subr.mxu0 0.0
        %542 = vmatpush1.msra.mxu0 0.0
        %543 = vmatprep.subr.mxu0 0.0
        %544 = vmatpush1.msra.mxu0 0.0
        %545 = vmatprep.subr.mxu0 0.0
        %546 = vmatpush1.msra.mxu0 0.0
        %547 = vmatprep.subr.mxu0 0.0
        %548 = vmatpush1.msra.mxu0 0.0
        %549 = vmatprep.subr.mxu0 0.0
        %550 = vmatpush1.msra.mxu0 0.0
        %551 = vmatprep.subr.mxu0 0.0
        %552 = vmatpush1.msra.mxu0 0.0
        %553 = vmatprep.subr.mxu0 0.0
        %554 = vmatpush1.msra.mxu0 0.0
        %555 = vmatprep.subr.mxu0 0.0
        %556 = vmatpush1.msra.mxu0 0.0
        %557 = vmatprep.subr.mxu0 0.0
        %558 = vmatpush1.msra.mxu0 0.0
        %559 = vmatprep.subr.mxu0 0.0
        %560 = vmatpush1.msra.mxu0 0.0
        %561 = vmatprep.subr.mxu0 0.0
        %562 = vmatpush1.msra.mxu0 0.0
        %563 = vmatprep.subr.mxu0 0.0
        %564 = vmatpush1.msra.mxu0 0.0
        %565 = vmatprep.subr.mxu0 0.0
        %566 = vmatpush1.msra.mxu0 0.0
        %567 = vmatprep.subr.mxu0 0.0
        %568 = vmatpush1.msra.mxu0 0.0
        %569 = vmatprep.subr.mxu0 0.0
        %570 = vmatpush1.msra.mxu0 0.0
        %571 = vmatprep.subr.mxu0 0.0
        %572 = vmatpush1.msra.mxu0 0.0
        %573 = vmatprep.subr.mxu0 0.0
        %574 = vmatpush1.msra.mxu0 0.0
        %575 = vmatprep.subr.mxu0 0.0
        %576 = vmatpush1.msra.mxu0 0.0
        %577 = vmatprep.subr.mxu0 0.0
        %578 = vmatpush1.msra.mxu0 0.0
        %579 = vmatprep.subr.mxu0 0.0
        %580 = vmatpush1.msra.mxu0 0.0
        %581 = vmatprep.subr.mxu0 0.0
        %582 = vmatpush1.msra.mxu0 0.0
        %583 = vmatprep.subr.mxu0 0.0
        %584 = vmatpush1.msra.mxu0 0.0
        %585 = vmatprep.subr.mxu0 0.0
        %586 = vmatpush1.msra.mxu0 0.0
        %587 = vmatprep.subr.mxu0 0.0
        %588 = vmatpush1.msra.mxu0 0.0
        %589 = vmatprep.mubr.f32.mxu0 0.0
        %590 = vmatmul.mubr.f32.gmra.mrb[0].mxu0 %v469
        %v591 = vpop.f32.mrb[0].mxu0
        %v592 = vadd.f32 %v380, %v591
        %v593 = vpop.f32.mrb[0].mxu0
        %594 = vmatprep.mubr.f32.mxu0 0.0
        %595 = vmatmul.mubr.f32.gmra.mrb[0].mxu0 %v472
        %v596 = vpop.f32.mrb[0].mxu0
        %v597 = vadd.f32 %v385, %v596
        %v598 = vpop.f32.mrb[0].mxu0
        %599 = vmatprep.mubr.f32.mxu0 0.0
        %600 = vmatmul.mubr.f32.gmra.mrb[0].mxu0 %v475
        %v601 = vpop.f32.mrb[0].mxu0
        %v602 = vadd.f32 %v390, %v601
        %v603 = vpop.f32.mrb[0].mxu0
        %604 = vmatprep.mubr.f32.mxu0 0.0
        %605 = vmatmul.mubr.f32.gmra.mrb[0].mxu0 %v478
        %v606 = vpop.f32.mrb[0].mxu0
        %v607 = vadd.f32 %v395, %v606
        %v608 = vpop.f32.mrb[0].mxu0
        %609 = vmatprep.mubr.f32.mxu0 0.0
        %610 = vmatmul.mubr.f32.gmra.mrb[0].mxu0 %v481
        %v611 = vpop.f32.mrb[0].mxu0
        %v612 = vadd.f32 %v400, %v611
        %v613 = vpop.f32.mrb[0].mxu0
        %614 = vmatprep.mubr.f32.mxu0 0.0
        %615 = vmatmul.mubr.f32.gmra.mrb[0].mxu0 %v484
        %v616 = vpop.f32.mrb[0].mxu0
        %v617 = vadd.f32 %v405, %v616
        %v618 = vpop.f32.mrb[0].mxu0
        %619 = vmatprep.mubr.f32.mxu0 0.0
        %620 = vmatmul.mubr.f32.gmra.mrb[0].mxu0 %v487
        %v621 = vpop.f32.mrb[0].mxu0
        %v622 = vadd.f32 %v410, %v621
        %v623 = vpop.f32.mrb[0].mxu0
        %624 = vmatprep.mubr.f32.mxu0 0.0
        %625 = vmatmul.mubr.f32.gmra.mrb[0].mxu0 %v490
        %v626 = vpop.f32.mrb[0].mxu0
        %v627 = vadd.f32 %v415, %v626
        %v628 = vpop.f32.mrb[0].mxu0
        %629 = vmatprep.mubr.f32.mxu0 0.0
        %630 = vmatmul.mubr.f32.gmra.mrb[0].mxu0 %v493
        %v631 = vpop.f32.mrb[0].mxu0
        %v632 = vadd.f32 %v420, %v631
        %v633 = vpop.f32.mrb[0].mxu0
        %634 = vmatprep.mubr.f32.mxu0 0.0
        %635 = vmatmul.mubr.f32.gmra.mrb[0].mxu0 %v496
        %v636 = vpop.f32.mrb[0].mxu0
        %v637 = vadd.f32 %v425, %v636
        %v638 = vpop.f32.mrb[0].mxu0
        %639 = vmatprep.mubr.f32.mxu0 0.0
        %640 = vmatmul.mubr.f32.gmra.mrb[0].mxu0 %v499
        %v641 = vpop.f32.mrb[0].mxu0
        %v642 = vadd.f32 %v430, %v641
        %v643 = vpop.f32.mrb[0].mxu0
        %644 = vmatprep.mubr.f32.mxu0 0.0
        %645 = vmatmul.mubr.f32.gmra.mrb[0].mxu0 %v502
        %v646 = vpop.f32.mrb[0].mxu0
        %v647 = vadd.f32 %v435, %v646
        %v648 = vpop.f32.mrb[0].mxu0
        %649 = vmatprep.mubr.f32.mxu0 0.0
        %650 = vmatmul.mubr.f32.gmra.mrb[0].mxu0 %v505
        %v651 = vpop.f32.mrb[0].mxu0
        %v652 = vadd.f32 %v440, %v651
        %v653 = vpop.f32.mrb[0].mxu0
        %654 = vmatprep.mubr.f32.mxu0 0.0
        %655 = vmatmul.mubr.f32.gmra.mrb[0].mxu0 %v508
        %v656 = vpop.f32.mrb[0].mxu0
        %v657 = vadd.f32 %v445, %v656
        %v658 = vpop.f32.mrb[0].mxu0
        %659 = vmatprep.mubr.f32.mxu0 0.0
        %660 = vmatmul.mubr.f32.gmra.mrb[0].mxu0 %v511
        %v661 = vpop.f32.mrb[0].mxu0
        %v662 = vadd.f32 %v450, %v661
        %v663 = vpop.f32.mrb[0].mxu0
        %664 = vmatprep.mubr.f32.mxu0 0.0
        %665 = vmatmul.mubr.f32.gmra.mrb[0].mxu0 %v514
        %v666 = vpop.f32.mrb[0].mxu0
        %v667 = vadd.f32 %v455, %v666
        %v668 = vpop.f32.mrb[0].mxu0
        %669 = vmatprep.mubr.f32.mxu0 0.0
        %670 = vmatmul.mubr.f32.gmra.mrb[0].mxu0 %v517
        %v671 = vpop.f32.mrb[0].mxu0
        %v672 = vadd.f32 %v460, %v671
        %v673 = vpop.f32.mrb[0].mxu0
        %674 = vmatprep.mubr.f32.mxu0 0.0
        %675 = vmatmul.mubr.f32.gmra.mrb[0].mxu0 %v520
        %v676 = vpop.f32.mrb[0].mxu0
        %v677 = vadd.f32 %v465, %v676
        %v678 = vpop.f32.mrb[0].mxu0
        %679 = vdwg.mxu0
        %s680 = sadd.s32 %s211, 2
        %s681 = scalar_lea.vmem %s209, %s680
        %v682 = vld [vmem:[%s681] sm:$0xff]
        %v683 = vld [vmem:[%s681 + $0x8] sm:$0xff]
        %v684 = vld [vmem:[%s681 + $0x10] sm:$0xff]
        %v685 = vld [vmem:[%s681 + $0x18] sm:$0xff]
        %v686 = vld [vmem:[%s681 + $0x20] sm:$0xff]
        %v687 = vld [vmem:[%s681 + $0x28] sm:$0xff]
        %v688 = vld [vmem:[%s681 + $0x30] sm:$0xff]
        %v689 = vld [vmem:[%s681 + $0x38] sm:$0xff]
        %v690 = vld [vmem:[%s681 + $0x40] sm:$0xff]
        %v691 = vld [vmem:[%s681 + $0x48] sm:$0xff]
        %v692 = vld [vmem:[%s681 + $0x50] sm:$0xff]
        %v693 = vld [vmem:[%s681 + $0x58] sm:$0xff]
        %v694 = vld [vmem:[%s681 + $0x60] sm:$0xff]
        %v695 = vld [vmem:[%s681 + $0x68] sm:$0xff]
        %v696 = vld [vmem:[%s681 + $0x70] sm:$0xff]
        %v697 = vld [vmem:[%s681 + $0x78] sm:$0xff]
        %v698 = vld [vmem:[%s681 + $0x80] sm:$0xff]
        %v699 = vld [vmem:[%s681 + $0x88] sm:$0xff]
        %s700 = scalar_lea.vmem %s1, 8
        %v701 = vld [vmem:[%s700] sm:$0xf]
        %v703 = vsel %vm254, %v682, 0
        %v706 = vsel %vm254, %v683, 0
        %v709 = vsel %vm254, %v684, 0
        %v712 = vsel %vm254, %v685, 0
        %v715 = vsel %vm254, %v686, 0
        %v718 = vsel %vm254, %v687, 0
        %v721 = vsel %vm254, %v688, 0
        %v724 = vsel %vm254, %v689, 0
        %v727 = vsel %vm254, %v690, 0
        %v730 = vsel %vm254, %v691, 0
        %v733 = vsel %vm254, %v692, 0
        %v736 = vsel %vm254, %v693, 0
        %v739 = vsel %vm254, %v694, 0
        %v742 = vsel %vm254, %v695, 0
        %v745 = vsel %vm254, %v696, 0
        %v748 = vsel %vm254, %v697, 0
        %v751 = vsel %vm254, %v698, 0
        %v754 = vsel %vm254, %v699, 0
        %v757 = vsel %vm309, %v701, 0
        %759 = vmatprep.subr.mxu0 0.0
        %760 = vmatpush1.msra.mxu0 %v757
        %761 = vmatprep.subr.mxu0 0.0
        %762 = vmatpush1.msra.mxu0 0.0
        %763 = vmatprep.subr.mxu0 0.0
        %764 = vmatpush1.msra.mxu0 0.0
        %765 = vmatprep.subr.mxu0 0.0
        %766 = vmatpush1.msra.mxu0 0.0
        %767 = vmatprep.subr.mxu0 0.0
        %768 = vmatpush1.msra.mxu0 0.0
        %769 = vmatprep.subr.mxu0 0.0
        %770 = vmatpush1.msra.mxu0 0.0
        %771 = vmatprep.subr.mxu0 0.0
        %772 = vmatpush1.msra.mxu0 0.0
        %773 = vmatprep.subr.mxu0 0.0
        %774 = vmatpush1.msra.mxu0 0.0
        %775 = vmatprep.subr.mxu0 0.0
        %776 = vmatpush1.msra.mxu0 0.0
        %777 = vmatprep.subr.mxu0 0.0
        %778 = vmatpush1.msra.mxu0 0.0
        %779 = vmatprep.subr.mxu0 0.0
        %780 = vmatpush1.msra.mxu0 0.0
        %781 = vmatprep.subr.mxu0 0.0
        %782 = vmatpush1.msra.mxu0 0.0
        %783 = vmatprep.subr.mxu0 0.0
        %784 = vmatpush1.msra.mxu0 0.0
        %785 = vmatprep.subr.mxu0 0.0
        %786 = vmatpush1.msra.mxu0 0.0
        %787 = vmatprep.subr.mxu0 0.0
        %788 = vmatpush1.msra.mxu0 0.0
        %789 = vmatprep.subr.mxu0 0.0
        %790 = vmatpush1.msra.mxu0 0.0
        %791 = vmatprep.subr.mxu0 0.0
        %792 = vmatpush1.msra.mxu0 0.0
        %793 = vmatprep.subr.mxu0 0.0
        %794 = vmatpush1.msra.mxu0 0.0
        %795 = vmatprep.subr.mxu0 0.0
        %796 = vmatpush1.msra.mxu0 0.0
        %797 = vmatprep.subr.mxu0 0.0
        %798 = vmatpush1.msra.mxu0 0.0
        %799 = vmatprep.subr.mxu0 0.0
        %800 = vmatpush1.msra.mxu0 0.0
        %801 = vmatprep.subr.mxu0 0.0
        %802 = vmatpush1.msra.mxu0 0.0
        %803 = vmatprep.subr.mxu0 0.0
        %804 = vmatpush1.msra.mxu0 0.0
        %805 = vmatprep.subr.mxu0 0.0
        %806 = vmatpush1.msra.mxu0 0.0
        %807 = vmatprep.subr.mxu0 0.0
        %808 = vmatpush1.msra.mxu0 0.0
        %809 = vmatprep.subr.mxu0 0.0
        %810 = vmatpush1.msra.mxu0 0.0
        %811 = vmatprep.subr.mxu0 0.0
        %812 = vmatpush1.msra.mxu0 0.0
        %813 = vmatprep.subr.mxu0 0.0
        %814 = vmatpush1.msra.mxu0 0.0
        %815 = vmatprep.subr.mxu0 0.0
        %816 = vmatpush1.msra.mxu0 0.0
        %817 = vmatprep.subr.mxu0 0.0
        %818 = vmatpush1.msra.mxu0 0.0
        %819 = vmatprep.subr.mxu0 0.0
        %820 = vmatpush1.msra.mxu0 0.0
        %821 = vmatprep.subr.mxu0 0.0
        %822 = vmatpush1.msra.mxu0 0.0
        %823 = vmatprep.mubr.f32.mxu0 0.0
        %824 = vmatmul.mubr.f32.gmra.mrb[0].mxu0 %v703
        %v825 = vpop.f32.mrb[0].mxu0
        %v826 = vadd.f32 0.0, %v825
        %v827 = vpop.f32.mrb[0].mxu0
        %828 = vmatprep.mubr.f32.mxu0 0.0
        %829 = vmatmul.mubr.f32.gmra.mrb[0].mxu0 %v706
        %v830 = vpop.f32.mrb[0].mxu0
        %v831 = vadd.f32 0.0, %v830
        %v832 = vpop.f32.mrb[0].mxu0
        %833 = vmatprep.mubr.f32.mxu0 0.0
        %834 = vmatmul.mubr.f32.gmra.mrb[0].mxu0 %v709
        %v835 = vpop.f32.mrb[0].mxu0
        %v836 = vadd.f32 0.0, %v835
        %v837 = vpop.f32.mrb[0].mxu0
        %838 = vmatprep.mubr.f32.mxu0 0.0
        %839 = vmatmul.mubr.f32.gmra.mrb[0].mxu0 %v712
        %v840 = vpop.f32.mrb[0].mxu0
        %v841 = vadd.f32 0.0, %v840
        %v842 = vpop.f32.mrb[0].mxu0
        %843 = vmatprep.mubr.f32.mxu0 0.0
        %844 = vmatmul.mubr.f32.gmra.mrb[0].mxu0 %v715
        %v845 = vpop.f32.mrb[0].mxu0
        %v846 = vadd.f32 0.0, %v845
        %v847 = vpop.f32.mrb[0].mxu0
        %848 = vmatprep.mubr.f32.mxu0 0.0
        %849 = vmatmul.mubr.f32.gmra.mrb[0].mxu0 %v718
        %v850 = vpop.f32.mrb[0].mxu0
        %v851 = vadd.f32 0.0, %v850
        %v852 = vpop.f32.mrb[0].mxu0
        %853 = vmatprep.mubr.f32.mxu0 0.0
        %854 = vmatmul.mubr.f32.gmra.mrb[0].mxu0 %v721
        %v855 = vpop.f32.mrb[0].mxu0
        %v856 = vadd.f32 0.0, %v855
        %v857 = vpop.f32.mrb[0].mxu0
        %858 = vmatprep.mubr.f32.mxu0 0.0
        %859 = vmatmul.mubr.f32.gmra.mrb[0].mxu0 %v724
        %v860 = vpop.f32.mrb[0].mxu0
        %v861 = vadd.f32 0.0, %v860
        %v862 = vpop.f32.mrb[0].mxu0
        %863 = vmatprep.mubr.f32.mxu0 0.0
        %864 = vmatmul.mubr.f32.gmra.mrb[0].mxu0 %v727
        %v865 = vpop.f32.mrb[0].mxu0
        %v866 = vadd.f32 0.0, %v865
        %v867 = vpop.f32.mrb[0].mxu0
        %868 = vmatprep.mubr.f32.mxu0 0.0
        %869 = vmatmul.mubr.f32.gmra.mrb[0].mxu0 %v730
        %v870 = vpop.f32.mrb[0].mxu0
        %v871 = vadd.f32 0.0, %v870
        %v872 = vpop.f32.mrb[0].mxu0
        %873 = vmatprep.mubr.f32.mxu0 0.0
        %874 = vmatmul.mubr.f32.gmra.mrb[0].mxu0 %v733
        %v875 = vpop.f32.mrb[0].mxu0
        %v876 = vadd.f32 0.0, %v875
        %v877 = vpop.f32.mrb[0].mxu0
        %878 = vmatprep.mubr.f32.mxu0 0.0
        %879 = vmatmul.mubr.f32.gmra.mrb[0].mxu0 %v736
        %v880 = vpop.f32.mrb[0].mxu0
        %v881 = vadd.f32 0.0, %v880
        %v882 = vpop.f32.mrb[0].mxu0
        %883 = vmatprep.mubr.f32.mxu0 0.0
        %884 = vmatmul.mubr.f32.gmra.mrb[0].mxu0 %v739
        %v885 = vpop.f32.mrb[0].mxu0
        %v886 = vadd.f32 0.0, %v885
        %v887 = vpop.f32.mrb[0].mxu0
        %888 = vmatprep.mubr.f32.mxu0 0.0
        %889 = vmatmul.mubr.f32.gmra.mrb[0].mxu0 %v742
        %v890 = vpop.f32.mrb[0].mxu0
        %v891 = vadd.f32 0.0, %v890
        %v892 = vpop.f32.mrb[0].mxu0
        %893 = vmatprep.mubr.f32.mxu0 0.0
        %894 = vmatmul.mubr.f32.gmra.mrb[0].mxu0 %v745
        %v895 = vpop.f32.mrb[0].mxu0
        %v896 = vadd.f32 0.0, %v895
        %v897 = vpop.f32.mrb[0].mxu0
        %898 = vmatprep.mubr.f32.mxu0 0.0
        %899 = vmatmul.mubr.f32.gmra.mrb[0].mxu0 %v748
        %v900 = vpop.f32.mrb[0].mxu0
        %v901 = vadd.f32 0.0, %v900
        %v902 = vpop.f32.mrb[0].mxu0
        %903 = vmatprep.mubr.f32.mxu0 0.0
        %904 = vmatmul.mubr.f32.gmra.mrb[0].mxu0 %v751
        %v905 = vpop.f32.mrb[0].mxu0
        %v906 = vadd.f32 0.0, %v905
        %v907 = vpop.f32.mrb[0].mxu0
        %908 = vmatprep.mubr.f32.mxu0 0.0
        %909 = vmatmul.mubr.f32.gmra.mrb[0].mxu0 %v754
        %v910 = vpop.f32.mrb[0].mxu0
        %v911 = vadd.f32 0.0, %v910
        %v912 = vpop.f32.mrb[0].mxu0
        %913 = vdwg.mxu0
        %v914 = vadd.f32 %v592, %v826
        %v915 = vadd.f32 %v597, %v831
        %v916 = vadd.f32 %v602, %v836
        %v917 = vadd.f32 %v607, %v841
        %v918 = vadd.f32 %v612, %v846
        %v919 = vadd.f32 %v617, %v851
        %v920 = vadd.f32 %v622, %v856
        %v921 = vadd.f32 %v627, %v861
        %v922 = vadd.f32 %v632, %v866
        %v923 = vadd.f32 %v637, %v871
        %v924 = vadd.f32 %v642, %v876
        %v925 = vadd.f32 %v647, %v881
        %v926 = vadd.f32 %v652, %v886
        %v927 = vadd.f32 %v657, %v891
        %v928 = vadd.f32 %v662, %v896
        %v929 = vadd.f32 %v667, %v901
        %v930 = vadd.f32 %v672, %v906
        %v931 = vadd.f32 %v677, %v911
        %s932 = sadd.s32 %s211, 18
        %s933 = scalar_lea.vmem %s209, %s932
        %v934 = vld [vmem:[%s933] sm:$0xff]
        %v935 = vld [vmem:[%s933 + $0x8] sm:$0xff]
        %v936 = vld [vmem:[%s933 + $0x10] sm:$0xff]
        %v937 = vld [vmem:[%s933 + $0x18] sm:$0xff]
        %v938 = vld [vmem:[%s933 + $0x20] sm:$0xff]
        %v939 = vld [vmem:[%s933 + $0x28] sm:$0xff]
        %v940 = vld [vmem:[%s933 + $0x30] sm:$0xff]
        %v941 = vld [vmem:[%s933 + $0x38] sm:$0xff]
        %v942 = vld [vmem:[%s933 + $0x40] sm:$0xff]
        %v943 = vld [vmem:[%s933 + $0x48] sm:$0xff]
        %v944 = vld [vmem:[%s933 + $0x50] sm:$0xff]
        %v945 = vld [vmem:[%s933 + $0x58] sm:$0xff]
        %v946 = vld [vmem:[%s933 + $0x60] sm:$0xff]
        %v947 = vld [vmem:[%s933 + $0x68] sm:$0xff]
        %v948 = vld [vmem:[%s933 + $0x70] sm:$0xff]
        %v949 = vld [vmem:[%s933 + $0x78] sm:$0xff]
        %v950 = vld [vmem:[%s933 + $0x80] sm:$0xff]
        %v951 = vld [vmem:[%s933 + $0x88] sm:$0xff]
        %s952 = scalar_lea.vmem %s1, 12
        %v953 = vld [vmem:[%s952] sm:$0xf]
        %v955 = vsel %vm254, %v934, 0
        %v958 = vsel %vm254, %v935, 0
        %v961 = vsel %vm254, %v936, 0
        %v964 = vsel %vm254, %v937, 0
        %v967 = vsel %vm254, %v938, 0
        %v970 = vsel %vm254, %v939, 0
        %v973 = vsel %vm254, %v940, 0
        %v976 = vsel %vm254, %v941, 0
        %v979 = vsel %vm254, %v942, 0
        %v982 = vsel %vm254, %v943, 0
        %v985 = vsel %vm254, %v944, 0
        %v988 = vsel %vm254, %v945, 0
        %v991 = vsel %vm254, %v946, 0
        %v994 = vsel %vm254, %v947, 0
        %v997 = vsel %vm254, %v948, 0
        %v1000 = vsel %vm254, %v949, 0
        %v1003 = vsel %vm254, %v950, 0
        %v1006 = vsel %vm254, %v951, 0
        %v1009 = vsel %vm309, %v953, 0
        %1011 = vmatprep.subr.mxu0 0.0
        %1012 = vmatpush1.msra.mxu0 %v1009
        %1013 = vmatprep.subr.mxu0 0.0
        %1014 = vmatpush1.msra.mxu0 0.0
        %1015 = vmatprep.subr.mxu0 0.0
        %1016 = vmatpush1.msra.mxu0 0.0
        %1017 = vmatprep.subr.mxu0 0.0
        %1018 = vmatpush1.msra.mxu0 0.0
        %1019 = vmatprep.subr.mxu0 0.0
        %1020 = vmatpush1.msra.mxu0 0.0
        %1021 = vmatprep.subr.mxu0 0.0
        %1022 = vmatpush1.msra.mxu0 0.0
        %1023 = vmatprep.subr.mxu0 0.0
        %1024 = vmatpush1.msra.mxu0 0.0
        %1025 = vmatprep.subr.mxu0 0.0
        %1026 = vmatpush1.msra.mxu0 0.0
        %1027 = vmatprep.subr.mxu0 0.0
        %1028 = vmatpush1.msra.mxu0 0.0
        %1029 = vmatprep.subr.mxu0 0.0
        %1030 = vmatpush1.msra.mxu0 0.0
        %1031 = vmatprep.subr.mxu0 0.0
        %1032 = vmatpush1.msra.mxu0 0.0
        %1033 = vmatprep.subr.mxu0 0.0
        %1034 = vmatpush1.msra.mxu0 0.0
        %1035 = vmatprep.subr.mxu0 0.0
        %1036 = vmatpush1.msra.mxu0 0.0
        %1037 = vmatprep.subr.mxu0 0.0
        %1038 = vmatpush1.msra.mxu0 0.0
        %1039 = vmatprep.subr.mxu0 0.0
        %1040 = vmatpush1.msra.mxu0 0.0
        %1041 = vmatprep.subr.mxu0 0.0
        %1042 = vmatpush1.msra.mxu0 0.0
        %1043 = vmatprep.subr.mxu0 0.0
        %1044 = vmatpush1.msra.mxu0 0.0
        %1045 = vmatprep.subr.mxu0 0.0
        %1046 = vmatpush1.msra.mxu0 0.0
        %1047 = vmatprep.subr.mxu0 0.0
        %1048 = vmatpush1.msra.mxu0 0.0
        %1049 = vmatprep.subr.mxu0 0.0
        %1050 = vmatpush1.msra.mxu0 0.0
        %1051 = vmatprep.subr.mxu0 0.0
        %1052 = vmatpush1.msra.mxu0 0.0
        %1053 = vmatprep.subr.mxu0 0.0
        %1054 = vmatpush1.msra.mxu0 0.0
        %1055 = vmatprep.subr.mxu0 0.0
        %1056 = vmatpush1.msra.mxu0 0.0
        %1057 = vmatprep.subr.mxu0 0.0
        %1058 = vmatpush1.msra.mxu0 0.0
        %1059 = vmatprep.subr.mxu0 0.0
        %1060 = vmatpush1.msra.mxu0 0.0
        %1061 = vmatprep.subr.mxu0 0.0
        %1062 = vmatpush1.msra.mxu0 0.0
        %1063 = vmatprep.subr.mxu0 0.0
        %1064 = vmatpush1.msra.mxu0 0.0
        %1065 = vmatprep.subr.mxu0 0.0
        %1066 = vmatpush1.msra.mxu0 0.0
        %1067 = vmatprep.subr.mxu0 0.0
        %1068 = vmatpush1.msra.mxu0 0.0
        %1069 = vmatprep.subr.mxu0 0.0
        %1070 = vmatpush1.msra.mxu0 0.0
        %1071 = vmatprep.subr.mxu0 0.0
        %1072 = vmatpush1.msra.mxu0 0.0
        %1073 = vmatprep.subr.mxu0 0.0
        %1074 = vmatpush1.msra.mxu0 0.0
        %1075 = vmatprep.mubr.f32.mxu0 0.0
        %1076 = vmatmul.mubr.f32.gmra.mrb[0].mxu0 %v955
        %v1077 = vpop.f32.mrb[0].mxu0
        %v1078 = vadd.f32 0.0, %v1077
        %v1079 = vpop.f32.mrb[0].mxu0
        %1080 = vmatprep.mubr.f32.mxu0 0.0
        %1081 = vmatmul.mubr.f32.gmra.mrb[0].mxu0 %v958
        %v1082 = vpop.f32.mrb[0].mxu0
        %v1083 = vadd.f32 0.0, %v1082
        %v1084 = vpop.f32.mrb[0].mxu0
        %1085 = vmatprep.mubr.f32.mxu0 0.0
        %1086 = vmatmul.mubr.f32.gmra.mrb[0].mxu0 %v961
        %v1087 = vpop.f32.mrb[0].mxu0
        %v1088 = vadd.f32 0.0, %v1087
        %v1089 = vpop.f32.mrb[0].mxu0
        %1090 = vmatprep.mubr.f32.mxu0 0.0
        %1091 = vmatmul.mubr.f32.gmra.mrb[0].mxu0 %v964
        %v1092 = vpop.f32.mrb[0].mxu0
        %v1093 = vadd.f32 0.0, %v1092
        %v1094 = vpop.f32.mrb[0].mxu0
        %1095 = vmatprep.mubr.f32.mxu0 0.0
        %1096 = vmatmul.mubr.f32.gmra.mrb[0].mxu0 %v967
        %v1097 = vpop.f32.mrb[0].mxu0
        %v1098 = vadd.f32 0.0, %v1097
        %v1099 = vpop.f32.mrb[0].mxu0
        %1100 = vmatprep.mubr.f32.mxu0 0.0
        %1101 = vmatmul.mubr.f32.gmra.mrb[0].mxu0 %v970
        %v1102 = vpop.f32.mrb[0].mxu0
        %v1103 = vadd.f32 0.0, %v1102
        %v1104 = vpop.f32.mrb[0].mxu0
        %1105 = vmatprep.mubr.f32.mxu0 0.0
        %1106 = vmatmul.mubr.f32.gmra.mrb[0].mxu0 %v973
        %v1107 = vpop.f32.mrb[0].mxu0
        %v1108 = vadd.f32 0.0, %v1107
        %v1109 = vpop.f32.mrb[0].mxu0
        %1110 = vmatprep.mubr.f32.mxu0 0.0
        %1111 = vmatmul.mubr.f32.gmra.mrb[0].mxu0 %v976
        %v1112 = vpop.f32.mrb[0].mxu0
        %v1113 = vadd.f32 0.0, %v1112
        %v1114 = vpop.f32.mrb[0].mxu0
        %1115 = vmatprep.mubr.f32.mxu0 0.0
        %1116 = vmatmul.mubr.f32.gmra.mrb[0].mxu0 %v979
        %v1117 = vpop.f32.mrb[0].mxu0
        %v1118 = vadd.f32 0.0, %v1117
        %v1119 = vpop.f32.mrb[0].mxu0
        %1120 = vmatprep.mubr.f32.mxu0 0.0
        %1121 = vmatmul.mubr.f32.gmra.mrb[0].mxu0 %v982
        %v1122 = vpop.f32.mrb[0].mxu0
        %v1123 = vadd.f32 0.0, %v1122
        %v1124 = vpop.f32.mrb[0].mxu0
        %1125 = vmatprep.mubr.f32.mxu0 0.0
        %1126 = vmatmul.mubr.f32.gmra.mrb[0].mxu0 %v985
        %v1127 = vpop.f32.mrb[0].mxu0
        %v1128 = vadd.f32 0.0, %v1127
        %v1129 = vpop.f32.mrb[0].mxu0
        %1130 = vmatprep.mubr.f32.mxu0 0.0
        %1131 = vmatmul.mubr.f32.gmra.mrb[0].mxu0 %v988
        %v1132 = vpop.f32.mrb[0].mxu0
        %v1133 = vadd.f32 0.0, %v1132
        %v1134 = vpop.f32.mrb[0].mxu0
        %1135 = vmatprep.mubr.f32.mxu0 0.0
        %1136 = vmatmul.mubr.f32.gmra.mrb[0].mxu0 %v991
        %v1137 = vpop.f32.mrb[0].mxu0
        %v1138 = vadd.f32 0.0, %v1137
        %v1139 = vpop.f32.mrb[0].mxu0
        %1140 = vmatprep.mubr.f32.mxu0 0.0
        %1141 = vmatmul.mubr.f32.gmra.mrb[0].mxu0 %v994
        %v1142 = vpop.f32.mrb[0].mxu0
        %v1143 = vadd.f32 0.0, %v1142
        %v1144 = vpop.f32.mrb[0].mxu0
        %1145 = vmatprep.mubr.f32.mxu0 0.0
        %1146 = vmatmul.mubr.f32.gmra.mrb[0].mxu0 %v997
        %v1147 = vpop.f32.mrb[0].mxu0
        %v1148 = vadd.f32 0.0, %v1147
        %v1149 = vpop.f32.mrb[0].mxu0
        %1150 = vmatprep.mubr.f32.mxu0 0.0
        %1151 = vmatmul.mubr.f32.gmra.mrb[0].mxu0 %v1000
        %v1152 = vpop.f32.mrb[0].mxu0
        %v1153 = vadd.f32 0.0, %v1152
        %v1154 = vpop.f32.mrb[0].mxu0
        %1155 = vmatprep.mubr.f32.mxu0 0.0
        %1156 = vmatmul.mubr.f32.gmra.mrb[0].mxu0 %v1003
        %v1157 = vpop.f32.mrb[0].mxu0
        %v1158 = vadd.f32 0.0, %v1157
        %v1159 = vpop.f32.mrb[0].mxu0
        %1160 = vmatprep.mubr.f32.mxu0 0.0
        %1161 = vmatmul.mubr.f32.gmra.mrb[0].mxu0 %v1006
        %v1162 = vpop.f32.mrb[0].mxu0
        %v1163 = vadd.f32 0.0, %v1162
        %v1164 = vpop.f32.mrb[0].mxu0
        %1165 = vdwg.mxu0
        %v1166 = vadd.f32 %v914, %v1078
        %v1167 = vadd.f32 %v915, %v1083
        %v1168 = vadd.f32 %v916, %v1088
        %v1169 = vadd.f32 %v917, %v1093
        %v1170 = vadd.f32 %v918, %v1098
        %v1171 = vadd.f32 %v919, %v1103
        %v1172 = vadd.f32 %v920, %v1108
        %v1173 = vadd.f32 %v921, %v1113
        %v1174 = vadd.f32 %v922, %v1118
        %v1175 = vadd.f32 %v923, %v1123
        %v1176 = vadd.f32 %v924, %v1128
        %v1177 = vadd.f32 %v925, %v1133
        %v1178 = vadd.f32 %v926, %v1138
        %v1179 = vadd.f32 %v927, %v1143
        %v1180 = vadd.f32 %v928, %v1148
        %v1181 = vadd.f32 %v929, %v1153
        %v1182 = vadd.f32 %v930, %v1158
        %v1183 = vadd.f32 %v931, %v1163
        %s1184 = sadd.s32 %s211, 19
        %s1185 = scalar_lea.vmem %s209, %s1184
        %v1186 = vld [vmem:[%s1185] sm:$0xff]
        %v1187 = vld [vmem:[%s1185 + $0x8] sm:$0xff]
        %v1188 = vld [vmem:[%s1185 + $0x10] sm:$0xff]
        %v1189 = vld [vmem:[%s1185 + $0x18] sm:$0xff]
        %v1190 = vld [vmem:[%s1185 + $0x20] sm:$0xff]
        %v1191 = vld [vmem:[%s1185 + $0x28] sm:$0xff]
        %v1192 = vld [vmem:[%s1185 + $0x30] sm:$0xff]
        %v1193 = vld [vmem:[%s1185 + $0x38] sm:$0xff]
        %v1194 = vld [vmem:[%s1185 + $0x40] sm:$0xff]
        %v1195 = vld [vmem:[%s1185 + $0x48] sm:$0xff]
        %v1196 = vld [vmem:[%s1185 + $0x50] sm:$0xff]
        %v1197 = vld [vmem:[%s1185 + $0x58] sm:$0xff]
        %v1198 = vld [vmem:[%s1185 + $0x60] sm:$0xff]
        %v1199 = vld [vmem:[%s1185 + $0x68] sm:$0xff]
        %v1200 = vld [vmem:[%s1185 + $0x70] sm:$0xff]
        %v1201 = vld [vmem:[%s1185 + $0x78] sm:$0xff]
        %v1202 = vld [vmem:[%s1185 + $0x80] sm:$0xff]
        %v1203 = vld [vmem:[%s1185 + $0x88] sm:$0xff]
        %s1204 = scalar_lea.vmem %s1, 16
        %v1205 = vld [vmem:[%s1204] sm:$0xf]
        %v1207 = vsel %vm254, %v1186, 0
        %v1210 = vsel %vm254, %v1187, 0
        %v1213 = vsel %vm254, %v1188, 0
        %v1216 = vsel %vm254, %v1189, 0
        %v1219 = vsel %vm254, %v1190, 0
        %v1222 = vsel %vm254, %v1191, 0
        %v1225 = vsel %vm254, %v1192, 0
        %v1228 = vsel %vm254, %v1193, 0
        %v1231 = vsel %vm254, %v1194, 0
        %v1234 = vsel %vm254, %v1195, 0
        %v1237 = vsel %vm254, %v1196, 0
        %v1240 = vsel %vm254, %v1197, 0
        %v1243 = vsel %vm254, %v1198, 0
        %v1246 = vsel %vm254, %v1199, 0
        %v1249 = vsel %vm254, %v1200, 0
        %v1252 = vsel %vm254, %v1201, 0
        %v1255 = vsel %vm254, %v1202, 0
        %v1258 = vsel %vm254, %v1203, 0
        %v1261 = vsel %vm309, %v1205, 0
        %1263 = vmatprep.subr.mxu0 0.0
        %1264 = vmatpush1.msra.mxu0 %v1261
        %1265 = vmatprep.subr.mxu0 0.0
        %1266 = vmatpush1.msra.mxu0 0.0
        %1267 = vmatprep.subr.mxu0 0.0
        %1268 = vmatpush1.msra.mxu0 0.0
        %1269 = vmatprep.subr.mxu0 0.0
        %1270 = vmatpush1.msra.mxu0 0.0
        %1271 = vmatprep.subr.mxu0 0.0
        %1272 = vmatpush1.msra.mxu0 0.0
        %1273 = vmatprep.subr.mxu0 0.0
        %1274 = vmatpush1.msra.mxu0 0.0
        %1275 = vmatprep.subr.mxu0 0.0
        %1276 = vmatpush1.msra.mxu0 0.0
        %1277 = vmatprep.subr.mxu0 0.0
        %1278 = vmatpush1.msra.mxu0 0.0
        %1279 = vmatprep.subr.mxu0 0.0
        %1280 = vmatpush1.msra.mxu0 0.0
        %1281 = vmatprep.subr.mxu0 0.0
        %1282 = vmatpush1.msra.mxu0 0.0
        %1283 = vmatprep.subr.mxu0 0.0
        %1284 = vmatpush1.msra.mxu0 0.0
        %1285 = vmatprep.subr.mxu0 0.0
        %1286 = vmatpush1.msra.mxu0 0.0
        %1287 = vmatprep.subr.mxu0 0.0
        %1288 = vmatpush1.msra.mxu0 0.0
        %1289 = vmatprep.subr.mxu0 0.0
        %1290 = vmatpush1.msra.mxu0 0.0
        %1291 = vmatprep.subr.mxu0 0.0
        %1292 = vmatpush1.msra.mxu0 0.0
        %1293 = vmatprep.subr.mxu0 0.0
        %1294 = vmatpush1.msra.mxu0 0.0
        %1295 = vmatprep.subr.mxu0 0.0
        %1296 = vmatpush1.msra.mxu0 0.0
        %1297 = vmatprep.subr.mxu0 0.0
        %1298 = vmatpush1.msra.mxu0 0.0
        %1299 = vmatprep.subr.mxu0 0.0
        %1300 = vmatpush1.msra.mxu0 0.0
        %1301 = vmatprep.subr.mxu0 0.0
        %1302 = vmatpush1.msra.mxu0 0.0
        %1303 = vmatprep.subr.mxu0 0.0
        %1304 = vmatpush1.msra.mxu0 0.0
        %1305 = vmatprep.subr.mxu0 0.0
        %1306 = vmatpush1.msra.mxu0 0.0
        %1307 = vmatprep.subr.mxu0 0.0
        %1308 = vmatpush1.msra.mxu0 0.0
        %1309 = vmatprep.subr.mxu0 0.0
        %1310 = vmatpush1.msra.mxu0 0.0
        %1311 = vmatprep.subr.mxu0 0.0
        %1312 = vmatpush1.msra.mxu0 0.0
        %1313 = vmatprep.subr.mxu0 0.0
        %1314 = vmatpush1.msra.mxu0 0.0
        %1315 = vmatprep.subr.mxu0 0.0
        %1316 = vmatpush1.msra.mxu0 0.0
        %1317 = vmatprep.subr.mxu0 0.0
        %1318 = vmatpush1.msra.mxu0 0.0
        %1319 = vmatprep.subr.mxu0 0.0
        %1320 = vmatpush1.msra.mxu0 0.0
        %1321 = vmatprep.subr.mxu0 0.0
        %1322 = vmatpush1.msra.mxu0 0.0
        %1323 = vmatprep.subr.mxu0 0.0
        %1324 = vmatpush1.msra.mxu0 0.0
        %1325 = vmatprep.subr.mxu0 0.0
        %1326 = vmatpush1.msra.mxu0 0.0
        %1327 = vmatprep.mubr.f32.mxu0 0.0
        %1328 = vmatmul.mubr.f32.gmra.mrb[0].mxu0 %v1207
        %v1329 = vpop.f32.mrb[0].mxu0
        %v1330 = vadd.f32 0.0, %v1329
        %v1331 = vpop.f32.mrb[0].mxu0
        %1332 = vmatprep.mubr.f32.mxu0 0.0
        %1333 = vmatmul.mubr.f32.gmra.mrb[0].mxu0 %v1210
        %v1334 = vpop.f32.mrb[0].mxu0
        %v1335 = vadd.f32 0.0, %v1334
        %v1336 = vpop.f32.mrb[0].mxu0
        %1337 = vmatprep.mubr.f32.mxu0 0.0
        %1338 = vmatmul.mubr.f32.gmra.mrb[0].mxu0 %v1213
        %v1339 = vpop.f32.mrb[0].mxu0
        %v1340 = vadd.f32 0.0, %v1339
        %v1341 = vpop.f32.mrb[0].mxu0
        %1342 = vmatprep.mubr.f32.mxu0 0.0
        %1343 = vmatmul.mubr.f32.gmra.mrb[0].mxu0 %v1216
        %v1344 = vpop.f32.mrb[0].mxu0
        %v1345 = vadd.f32 0.0, %v1344
        %v1346 = vpop.f32.mrb[0].mxu0
        %1347 = vmatprep.mubr.f32.mxu0 0.0
        %1348 = vmatmul.mubr.f32.gmra.mrb[0].mxu0 %v1219
        %v1349 = vpop.f32.mrb[0].mxu0
        %v1350 = vadd.f32 0.0, %v1349
        %v1351 = vpop.f32.mrb[0].mxu0
        %1352 = vmatprep.mubr.f32.mxu0 0.0
        %1353 = vmatmul.mubr.f32.gmra.mrb[0].mxu0 %v1222
        %v1354 = vpop.f32.mrb[0].mxu0
        %v1355 = vadd.f32 0.0, %v1354
        %v1356 = vpop.f32.mrb[0].mxu0
        %1357 = vmatprep.mubr.f32.mxu0 0.0
        %1358 = vmatmul.mubr.f32.gmra.mrb[0].mxu0 %v1225
        %v1359 = vpop.f32.mrb[0].mxu0
        %v1360 = vadd.f32 0.0, %v1359
        %v1361 = vpop.f32.mrb[0].mxu0
        %1362 = vmatprep.mubr.f32.mxu0 0.0
        %1363 = vmatmul.mubr.f32.gmra.mrb[0].mxu0 %v1228
        %v1364 = vpop.f32.mrb[0].mxu0
        %v1365 = vadd.f32 0.0, %v1364
        %v1366 = vpop.f32.mrb[0].mxu0
        %1367 = vmatprep.mubr.f32.mxu0 0.0
        %1368 = vmatmul.mubr.f32.gmra.mrb[0].mxu0 %v1231
        %v1369 = vpop.f32.mrb[0].mxu0
        %v1370 = vadd.f32 0.0, %v1369
        %v1371 = vpop.f32.mrb[0].mxu0
        %1372 = vmatprep.mubr.f32.mxu0 0.0
        %1373 = vmatmul.mubr.f32.gmra.mrb[0].mxu0 %v1234
        %v1374 = vpop.f32.mrb[0].mxu0
        %v1375 = vadd.f32 0.0, %v1374
        %v1376 = vpop.f32.mrb[0].mxu0
        %1377 = vmatprep.mubr.f32.mxu0 0.0
        %1378 = vmatmul.mubr.f32.gmra.mrb[0].mxu0 %v1237
        %v1379 = vpop.f32.mrb[0].mxu0
        %v1380 = vadd.f32 0.0, %v1379
        %v1381 = vpop.f32.mrb[0].mxu0
        %1382 = vmatprep.mubr.f32.mxu0 0.0
        %1383 = vmatmul.mubr.f32.gmra.mrb[0].mxu0 %v1240
        %v1384 = vpop.f32.mrb[0].mxu0
        %v1385 = vadd.f32 0.0, %v1384
        %v1386 = vpop.f32.mrb[0].mxu0
        %1387 = vmatprep.mubr.f32.mxu0 0.0
        %1388 = vmatmul.mubr.f32.gmra.mrb[0].mxu0 %v1243
        %v1389 = vpop.f32.mrb[0].mxu0
        %v1390 = vadd.f32 0.0, %v1389
        %v1391 = vpop.f32.mrb[0].mxu0
        %1392 = vmatprep.mubr.f32.mxu0 0.0
        %1393 = vmatmul.mubr.f32.gmra.mrb[0].mxu0 %v1246
        %v1394 = vpop.f32.mrb[0].mxu0
        %v1395 = vadd.f32 0.0, %v1394
        %v1396 = vpop.f32.mrb[0].mxu0
        %1397 = vmatprep.mubr.f32.mxu0 0.0
        %1398 = vmatmul.mubr.f32.gmra.mrb[0].mxu0 %v1249
        %v1399 = vpop.f32.mrb[0].mxu0
        %v1400 = vadd.f32 0.0, %v1399
        %v1401 = vpop.f32.mrb[0].mxu0
        %1402 = vmatprep.mubr.f32.mxu0 0.0
        %1403 = vmatmul.mubr.f32.gmra.mrb[0].mxu0 %v1252
        %v1404 = vpop.f32.mrb[0].mxu0
        %v1405 = vadd.f32 0.0, %v1404
        %v1406 = vpop.f32.mrb[0].mxu0
        %1407 = vmatprep.mubr.f32.mxu0 0.0
        %1408 = vmatmul.mubr.f32.gmra.mrb[0].mxu0 %v1255
        %v1409 = vpop.f32.mrb[0].mxu0
        %v1410 = vadd.f32 0.0, %v1409
        %v1411 = vpop.f32.mrb[0].mxu0
        %1412 = vmatprep.mubr.f32.mxu0 0.0
        %1413 = vmatmul.mubr.f32.gmra.mrb[0].mxu0 %v1258
        %v1414 = vpop.f32.mrb[0].mxu0
        %v1415 = vadd.f32 0.0, %v1414
        %v1416 = vpop.f32.mrb[0].mxu0
        %1417 = vdwg.mxu0
        %v1418 = vadd.f32 %v1166, %v1330
        %v1419 = vadd.f32 %v1167, %v1335
        %v1420 = vadd.f32 %v1168, %v1340
        %v1421 = vadd.f32 %v1169, %v1345
        %v1422 = vadd.f32 %v1170, %v1350
        %v1423 = vadd.f32 %v1171, %v1355
        %v1424 = vadd.f32 %v1172, %v1360
        %v1425 = vadd.f32 %v1173, %v1365
        %v1426 = vadd.f32 %v1174, %v1370
        %v1427 = vadd.f32 %v1175, %v1375
        %v1428 = vadd.f32 %v1176, %v1380
        %v1429 = vadd.f32 %v1177, %v1385
        %v1430 = vadd.f32 %v1178, %v1390
        %v1431 = vadd.f32 %v1179, %v1395
        %v1432 = vadd.f32 %v1180, %v1400
        %v1433 = vadd.f32 %v1181, %v1405
        %v1434 = vadd.f32 %v1182, %v1410
        %v1435 = vadd.f32 %v1183, %v1415
        %s1436 = sadd.s32 %s211, 20
        %s1437 = scalar_lea.vmem %s209, %s1436
        %v1438 = vld [vmem:[%s1437] sm:$0xff]
        %v1439 = vld [vmem:[%s1437 + $0x8] sm:$0xff]
        %v1440 = vld [vmem:[%s1437 + $0x10] sm:$0xff]
        %v1441 = vld [vmem:[%s1437 + $0x18] sm:$0xff]
        %v1442 = vld [vmem:[%s1437 + $0x20] sm:$0xff]
        %v1443 = vld [vmem:[%s1437 + $0x28] sm:$0xff]
        %v1444 = vld [vmem:[%s1437 + $0x30] sm:$0xff]
        %v1445 = vld [vmem:[%s1437 + $0x38] sm:$0xff]
        %v1446 = vld [vmem:[%s1437 + $0x40] sm:$0xff]
        %v1447 = vld [vmem:[%s1437 + $0x48] sm:$0xff]
        %v1448 = vld [vmem:[%s1437 + $0x50] sm:$0xff]
        %v1449 = vld [vmem:[%s1437 + $0x58] sm:$0xff]
        %v1450 = vld [vmem:[%s1437 + $0x60] sm:$0xff]
        %v1451 = vld [vmem:[%s1437 + $0x68] sm:$0xff]
        %v1452 = vld [vmem:[%s1437 + $0x70] sm:$0xff]
        %v1453 = vld [vmem:[%s1437 + $0x78] sm:$0xff]
        %v1454 = vld [vmem:[%s1437 + $0x80] sm:$0xff]
        %v1455 = vld [vmem:[%s1437 + $0x88] sm:$0xff]
        %s1456 = scalar_lea.vmem %s1, 20
        %v1457 = vld [vmem:[%s1456] sm:$0xf]
        %v1459 = vsel %vm254, %v1438, 0
        %v1462 = vsel %vm254, %v1439, 0
        %v1465 = vsel %vm254, %v1440, 0
        %v1468 = vsel %vm254, %v1441, 0
        %v1471 = vsel %vm254, %v1442, 0
        %v1474 = vsel %vm254, %v1443, 0
        %v1477 = vsel %vm254, %v1444, 0
        %v1480 = vsel %vm254, %v1445, 0
        %v1483 = vsel %vm254, %v1446, 0
        %v1486 = vsel %vm254, %v1447, 0
        %v1489 = vsel %vm254, %v1448, 0
        %v1492 = vsel %vm254, %v1449, 0
        %v1495 = vsel %vm254, %v1450, 0
        %v1498 = vsel %vm254, %v1451, 0
        %v1501 = vsel %vm254, %v1452, 0
        %v1504 = vsel %vm254, %v1453, 0
        %v1507 = vsel %vm254, %v1454, 0
        %v1510 = vsel %vm254, %v1455, 0
        %v1513 = vsel %vm309, %v1457, 0
        %1515 = vmatprep.subr.mxu0 0.0
        %1516 = vmatpush1.msra.mxu0 %v1513
        %1517 = vmatprep.subr.mxu0 0.0
        %1518 = vmatpush1.msra.mxu0 0.0
        %1519 = vmatprep.subr.mxu0 0.0
        %1520 = vmatpush1.msra.mxu0 0.0
        %1521 = vmatprep.subr.mxu0 0.0
        %1522 = vmatpush1.msra.mxu0 0.0
        %1523 = vmatprep.subr.mxu0 0.0
        %1524 = vmatpush1.msra.mxu0 0.0
        %1525 = vmatprep.subr.mxu0 0.0
        %1526 = vmatpush1.msra.mxu0 0.0
        %1527 = vmatprep.subr.mxu0 0.0
        %1528 = vmatpush1.msra.mxu0 0.0
        %1529 = vmatprep.subr.mxu0 0.0
        %1530 = vmatpush1.msra.mxu0 0.0
        %1531 = vmatprep.subr.mxu0 0.0
        %1532 = vmatpush1.msra.mxu0 0.0
        %1533 = vmatprep.subr.mxu0 0.0
        %1534 = vmatpush1.msra.mxu0 0.0
        %1535 = vmatprep.subr.mxu0 0.0
        %1536 = vmatpush1.msra.mxu0 0.0
        %1537 = vmatprep.subr.mxu0 0.0
        %1538 = vmatpush1.msra.mxu0 0.0
        %1539 = vmatprep.subr.mxu0 0.0
        %1540 = vmatpush1.msra.mxu0 0.0
        %1541 = vmatprep.subr.mxu0 0.0
        %1542 = vmatpush1.msra.mxu0 0.0
        %1543 = vmatprep.subr.mxu0 0.0
        %1544 = vmatpush1.msra.mxu0 0.0
        %1545 = vmatprep.subr.mxu0 0.0
        %1546 = vmatpush1.msra.mxu0 0.0
        %1547 = vmatprep.subr.mxu0 0.0
        %1548 = vmatpush1.msra.mxu0 0.0
        %1549 = vmatprep.subr.mxu0 0.0
        %1550 = vmatpush1.msra.mxu0 0.0
        %1551 = vmatprep.subr.mxu0 0.0
        %1552 = vmatpush1.msra.mxu0 0.0
        %1553 = vmatprep.subr.mxu0 0.0
        %1554 = vmatpush1.msra.mxu0 0.0
        %1555 = vmatprep.subr.mxu0 0.0
        %1556 = vmatpush1.msra.mxu0 0.0
        %1557 = vmatprep.subr.mxu0 0.0
        %1558 = vmatpush1.msra.mxu0 0.0
        %1559 = vmatprep.subr.mxu0 0.0
        %1560 = vmatpush1.msra.mxu0 0.0
        %1561 = vmatprep.subr.mxu0 0.0
        %1562 = vmatpush1.msra.mxu0 0.0
        %1563 = vmatprep.subr.mxu0 0.0
        %1564 = vmatpush1.msra.mxu0 0.0
        %1565 = vmatprep.subr.mxu0 0.0
        %1566 = vmatpush1.msra.mxu0 0.0
        %1567 = vmatprep.subr.mxu0 0.0
        %1568 = vmatpush1.msra.mxu0 0.0
        %1569 = vmatprep.subr.mxu0 0.0
        %1570 = vmatpush1.msra.mxu0 0.0
        %1571 = vmatprep.subr.mxu0 0.0
        %1572 = vmatpush1.msra.mxu0 0.0
        %1573 = vmatprep.subr.mxu0 0.0
        %1574 = vmatpush1.msra.mxu0 0.0
        %1575 = vmatprep.subr.mxu0 0.0
        %1576 = vmatpush1.msra.mxu0 0.0
        %1577 = vmatprep.subr.mxu0 0.0
        %1578 = vmatpush1.msra.mxu0 0.0
        %1579 = vmatprep.mubr.f32.mxu0 0.0
        %1580 = vmatmul.mubr.f32.gmra.mrb[0].mxu0 %v1459
        %v1581 = vpop.f32.mrb[0].mxu0
        %v1582 = vadd.f32 0.0, %v1581
        %v1583 = vpop.f32.mrb[0].mxu0
        %1584 = vmatprep.mubr.f32.mxu0 0.0
        %1585 = vmatmul.mubr.f32.gmra.mrb[0].mxu0 %v1462
        %v1586 = vpop.f32.mrb[0].mxu0
        %v1587 = vadd.f32 0.0, %v1586
        %v1588 = vpop.f32.mrb[0].mxu0
        %1589 = vmatprep.mubr.f32.mxu0 0.0
        %1590 = vmatmul.mubr.f32.gmra.mrb[0].mxu0 %v1465
        %v1591 = vpop.f32.mrb[0].mxu0
        %v1592 = vadd.f32 0.0, %v1591
        %v1593 = vpop.f32.mrb[0].mxu0
        %1594 = vmatprep.mubr.f32.mxu0 0.0
        %1595 = vmatmul.mubr.f32.gmra.mrb[0].mxu0 %v1468
        %v1596 = vpop.f32.mrb[0].mxu0
        %v1597 = vadd.f32 0.0, %v1596
        %v1598 = vpop.f32.mrb[0].mxu0
        %1599 = vmatprep.mubr.f32.mxu0 0.0
        %1600 = vmatmul.mubr.f32.gmra.mrb[0].mxu0 %v1471
        %v1601 = vpop.f32.mrb[0].mxu0
        %v1602 = vadd.f32 0.0, %v1601
        %v1603 = vpop.f32.mrb[0].mxu0
        %1604 = vmatprep.mubr.f32.mxu0 0.0
        %1605 = vmatmul.mubr.f32.gmra.mrb[0].mxu0 %v1474
        %v1606 = vpop.f32.mrb[0].mxu0
        %v1607 = vadd.f32 0.0, %v1606
        %v1608 = vpop.f32.mrb[0].mxu0
        %1609 = vmatprep.mubr.f32.mxu0 0.0
        %1610 = vmatmul.mubr.f32.gmra.mrb[0].mxu0 %v1477
        %v1611 = vpop.f32.mrb[0].mxu0
        %v1612 = vadd.f32 0.0, %v1611
        %v1613 = vpop.f32.mrb[0].mxu0
        %1614 = vmatprep.mubr.f32.mxu0 0.0
        %1615 = vmatmul.mubr.f32.gmra.mrb[0].mxu0 %v1480
        %v1616 = vpop.f32.mrb[0].mxu0
        %v1617 = vadd.f32 0.0, %v1616
        %v1618 = vpop.f32.mrb[0].mxu0
        %1619 = vmatprep.mubr.f32.mxu0 0.0
        %1620 = vmatmul.mubr.f32.gmra.mrb[0].mxu0 %v1483
        %v1621 = vpop.f32.mrb[0].mxu0
        %v1622 = vadd.f32 0.0, %v1621
        %v1623 = vpop.f32.mrb[0].mxu0
        %1624 = vmatprep.mubr.f32.mxu0 0.0
        %1625 = vmatmul.mubr.f32.gmra.mrb[0].mxu0 %v1486
        %v1626 = vpop.f32.mrb[0].mxu0
        %v1627 = vadd.f32 0.0, %v1626
        %v1628 = vpop.f32.mrb[0].mxu0
        %1629 = vmatprep.mubr.f32.mxu0 0.0
        %1630 = vmatmul.mubr.f32.gmra.mrb[0].mxu0 %v1489
        %v1631 = vpop.f32.mrb[0].mxu0
        %v1632 = vadd.f32 0.0, %v1631
        %v1633 = vpop.f32.mrb[0].mxu0
        %1634 = vmatprep.mubr.f32.mxu0 0.0
        %1635 = vmatmul.mubr.f32.gmra.mrb[0].mxu0 %v1492
        %v1636 = vpop.f32.mrb[0].mxu0
        %v1637 = vadd.f32 0.0, %v1636
        %v1638 = vpop.f32.mrb[0].mxu0
        %1639 = vmatprep.mubr.f32.mxu0 0.0
        %1640 = vmatmul.mubr.f32.gmra.mrb[0].mxu0 %v1495
        %v1641 = vpop.f32.mrb[0].mxu0
        %v1642 = vadd.f32 0.0, %v1641
        %v1643 = vpop.f32.mrb[0].mxu0
        %1644 = vmatprep.mubr.f32.mxu0 0.0
        %1645 = vmatmul.mubr.f32.gmra.mrb[0].mxu0 %v1498
        %v1646 = vpop.f32.mrb[0].mxu0
        %v1647 = vadd.f32 0.0, %v1646
        %v1648 = vpop.f32.mrb[0].mxu0
        %1649 = vmatprep.mubr.f32.mxu0 0.0
        %1650 = vmatmul.mubr.f32.gmra.mrb[0].mxu0 %v1501
        %v1651 = vpop.f32.mrb[0].mxu0
        %v1652 = vadd.f32 0.0, %v1651
        %v1653 = vpop.f32.mrb[0].mxu0
        %1654 = vmatprep.mubr.f32.mxu0 0.0
        %1655 = vmatmul.mubr.f32.gmra.mrb[0].mxu0 %v1504
        %v1656 = vpop.f32.mrb[0].mxu0
        %v1657 = vadd.f32 0.0, %v1656
        %v1658 = vpop.f32.mrb[0].mxu0
        %1659 = vmatprep.mubr.f32.mxu0 0.0
        %1660 = vmatmul.mubr.f32.gmra.mrb[0].mxu0 %v1507
        %v1661 = vpop.f32.mrb[0].mxu0
        %v1662 = vadd.f32 0.0, %v1661
        %v1663 = vpop.f32.mrb[0].mxu0
        %1664 = vmatprep.mubr.f32.mxu0 0.0
        %1665 = vmatmul.mubr.f32.gmra.mrb[0].mxu0 %v1510
        %v1666 = vpop.f32.mrb[0].mxu0
        %v1667 = vadd.f32 0.0, %v1666
        %v1668 = vpop.f32.mrb[0].mxu0
        %1669 = vdwg.mxu0
        %v1670 = vadd.f32 %v1418, %v1582
        %v1671 = vadd.f32 %v1419, %v1587
        %v1672 = vadd.f32 %v1420, %v1592
        %v1673 = vadd.f32 %v1421, %v1597
        %v1674 = vadd.f32 %v1422, %v1602
        %v1675 = vadd.f32 %v1423, %v1607
        %v1676 = vadd.f32 %v1424, %v1612
        %v1677 = vadd.f32 %v1425, %v1617
        %v1678 = vadd.f32 %v1426, %v1622
        %v1679 = vadd.f32 %v1427, %v1627
        %v1680 = vadd.f32 %v1428, %v1632
        %v1681 = vadd.f32 %v1429, %v1637
        %v1682 = vadd.f32 %v1430, %v1642
        %v1683 = vadd.f32 %v1431, %v1647
        %v1684 = vadd.f32 %v1432, %v1652
        %v1685 = vadd.f32 %v1433, %v1657
        %v1686 = vadd.f32 %v1434, %v1662
        %v1687 = vadd.f32 %v1435, %v1667
        %s1688 = sadd.s32 %s211, 36
        %s1689 = scalar_lea.vmem %s209, %s1688
        %v1690 = vld [vmem:[%s1689] sm:$0xff]
        %v1691 = vld [vmem:[%s1689 + $0x8] sm:$0xff]
        %v1692 = vld [vmem:[%s1689 + $0x10] sm:$0xff]
        %v1693 = vld [vmem:[%s1689 + $0x18] sm:$0xff]
        %v1694 = vld [vmem:[%s1689 + $0x20] sm:$0xff]
        %v1695 = vld [vmem:[%s1689 + $0x28] sm:$0xff]
        %v1696 = vld [vmem:[%s1689 + $0x30] sm:$0xff]
        %v1697 = vld [vmem:[%s1689 + $0x38] sm:$0xff]
        %v1698 = vld [vmem:[%s1689 + $0x40] sm:$0xff]
        %v1699 = vld [vmem:[%s1689 + $0x48] sm:$0xff]
        %v1700 = vld [vmem:[%s1689 + $0x50] sm:$0xff]
        %v1701 = vld [vmem:[%s1689 + $0x58] sm:$0xff]
        %v1702 = vld [vmem:[%s1689 + $0x60] sm:$0xff]
        %v1703 = vld [vmem:[%s1689 + $0x68] sm:$0xff]
        %v1704 = vld [vmem:[%s1689 + $0x70] sm:$0xff]
        %v1705 = vld [vmem:[%s1689 + $0x78] sm:$0xff]
        %v1706 = vld [vmem:[%s1689 + $0x80] sm:$0xff]
        %v1707 = vld [vmem:[%s1689 + $0x88] sm:$0xff]
        %s1708 = scalar_lea.vmem %s1, 24
        %v1709 = vld [vmem:[%s1708] sm:$0xf]
        %v1711 = vsel %vm254, %v1690, 0
        %v1714 = vsel %vm254, %v1691, 0
        %v1717 = vsel %vm254, %v1692, 0
        %v1720 = vsel %vm254, %v1693, 0
        %v1723 = vsel %vm254, %v1694, 0
        %v1726 = vsel %vm254, %v1695, 0
        %v1729 = vsel %vm254, %v1696, 0
        %v1732 = vsel %vm254, %v1697, 0
        %v1735 = vsel %vm254, %v1698, 0
        %v1738 = vsel %vm254, %v1699, 0
        %v1741 = vsel %vm254, %v1700, 0
        %v1744 = vsel %vm254, %v1701, 0
        %v1747 = vsel %vm254, %v1702, 0
        %v1750 = vsel %vm254, %v1703, 0
        %v1753 = vsel %vm254, %v1704, 0
        %v1756 = vsel %vm254, %v1705, 0
        %v1759 = vsel %vm254, %v1706, 0
        %v1762 = vsel %vm254, %v1707, 0
        %v1765 = vsel %vm309, %v1709, 0
        %1767 = vmatprep.subr.mxu0 0.0
        %1768 = vmatpush1.msra.mxu0 %v1765
        %1769 = vmatprep.subr.mxu0 0.0
        %1770 = vmatpush1.msra.mxu0 0.0
        %1771 = vmatprep.subr.mxu0 0.0
        %1772 = vmatpush1.msra.mxu0 0.0
        %1773 = vmatprep.subr.mxu0 0.0
        %1774 = vmatpush1.msra.mxu0 0.0
        %1775 = vmatprep.subr.mxu0 0.0
        %1776 = vmatpush1.msra.mxu0 0.0
        %1777 = vmatprep.subr.mxu0 0.0
        %1778 = vmatpush1.msra.mxu0 0.0
        %1779 = vmatprep.subr.mxu0 0.0
        %1780 = vmatpush1.msra.mxu0 0.0
        %1781 = vmatprep.subr.mxu0 0.0
        %1782 = vmatpush1.msra.mxu0 0.0
        %1783 = vmatprep.subr.mxu0 0.0
        %1784 = vmatpush1.msra.mxu0 0.0
        %1785 = vmatprep.subr.mxu0 0.0
        %1786 = vmatpush1.msra.mxu0 0.0
        %1787 = vmatprep.subr.mxu0 0.0
        %1788 = vmatpush1.msra.mxu0 0.0
        %1789 = vmatprep.subr.mxu0 0.0
        %1790 = vmatpush1.msra.mxu0 0.0
        %1791 = vmatprep.subr.mxu0 0.0
        %1792 = vmatpush1.msra.mxu0 0.0
        %1793 = vmatprep.subr.mxu0 0.0
        %1794 = vmatpush1.msra.mxu0 0.0
        %1795 = vmatprep.subr.mxu0 0.0
        %1796 = vmatpush1.msra.mxu0 0.0
        %1797 = vmatprep.subr.mxu0 0.0
        %1798 = vmatpush1.msra.mxu0 0.0
        %1799 = vmatprep.subr.mxu0 0.0
        %1800 = vmatpush1.msra.mxu0 0.0
        %1801 = vmatprep.subr.mxu0 0.0
        %1802 = vmatpush1.msra.mxu0 0.0
        %1803 = vmatprep.subr.mxu0 0.0
        %1804 = vmatpush1.msra.mxu0 0.0
        %1805 = vmatprep.subr.mxu0 0.0
        %1806 = vmatpush1.msra.mxu0 0.0
        %1807 = vmatprep.subr.mxu0 0.0
        %1808 = vmatpush1.msra.mxu0 0.0
        %1809 = vmatprep.subr.mxu0 0.0
        %1810 = vmatpush1.msra.mxu0 0.0
        %1811 = vmatprep.subr.mxu0 0.0
        %1812 = vmatpush1.msra.mxu0 0.0
        %1813 = vmatprep.subr.mxu0 0.0
        %1814 = vmatpush1.msra.mxu0 0.0
        %1815 = vmatprep.subr.mxu0 0.0
        %1816 = vmatpush1.msra.mxu0 0.0
        %1817 = vmatprep.subr.mxu0 0.0
        %1818 = vmatpush1.msra.mxu0 0.0
        %1819 = vmatprep.subr.mxu0 0.0
        %1820 = vmatpush1.msra.mxu0 0.0
        %1821 = vmatprep.subr.mxu0 0.0
        %1822 = vmatpush1.msra.mxu0 0.0
        %1823 = vmatprep.subr.mxu0 0.0
        %1824 = vmatpush1.msra.mxu0 0.0
        %1825 = vmatprep.subr.mxu0 0.0
        %1826 = vmatpush1.msra.mxu0 0.0
        %1827 = vmatprep.subr.mxu0 0.0
        %1828 = vmatpush1.msra.mxu0 0.0
        %1829 = vmatprep.subr.mxu0 0.0
        %1830 = vmatpush1.msra.mxu0 0.0
        %1831 = vmatprep.mubr.f32.mxu0 0.0
        %1832 = vmatmul.mubr.f32.gmra.mrb[0].mxu0 %v1711
        %v1833 = vpop.f32.mrb[0].mxu0
        %v1834 = vadd.f32 0.0, %v1833
        %v1835 = vpop.f32.mrb[0].mxu0
        %1836 = vmatprep.mubr.f32.mxu0 0.0
        %1837 = vmatmul.mubr.f32.gmra.mrb[0].mxu0 %v1714
        %v1838 = vpop.f32.mrb[0].mxu0
        %v1839 = vadd.f32 0.0, %v1838
        %v1840 = vpop.f32.mrb[0].mxu0
        %1841 = vmatprep.mubr.f32.mxu0 0.0
        %1842 = vmatmul.mubr.f32.gmra.mrb[0].mxu0 %v1717
        %v1843 = vpop.f32.mrb[0].mxu0
        %v1844 = vadd.f32 0.0, %v1843
        %v1845 = vpop.f32.mrb[0].mxu0
        %1846 = vmatprep.mubr.f32.mxu0 0.0
        %1847 = vmatmul.mubr.f32.gmra.mrb[0].mxu0 %v1720
        %v1848 = vpop.f32.mrb[0].mxu0
        %v1849 = vadd.f32 0.0, %v1848
        %v1850 = vpop.f32.mrb[0].mxu0
        %1851 = vmatprep.mubr.f32.mxu0 0.0
        %1852 = vmatmul.mubr.f32.gmra.mrb[0].mxu0 %v1723
        %v1853 = vpop.f32.mrb[0].mxu0
        %v1854 = vadd.f32 0.0, %v1853
        %v1855 = vpop.f32.mrb[0].mxu0
        %1856 = vmatprep.mubr.f32.mxu0 0.0
        %1857 = vmatmul.mubr.f32.gmra.mrb[0].mxu0 %v1726
        %v1858 = vpop.f32.mrb[0].mxu0
        %v1859 = vadd.f32 0.0, %v1858
        %v1860 = vpop.f32.mrb[0].mxu0
        %1861 = vmatprep.mubr.f32.mxu0 0.0
        %1862 = vmatmul.mubr.f32.gmra.mrb[0].mxu0 %v1729
        %v1863 = vpop.f32.mrb[0].mxu0
        %v1864 = vadd.f32 0.0, %v1863
        %v1865 = vpop.f32.mrb[0].mxu0
        %1866 = vmatprep.mubr.f32.mxu0 0.0
        %1867 = vmatmul.mubr.f32.gmra.mrb[0].mxu0 %v1732
        %v1868 = vpop.f32.mrb[0].mxu0
        %v1869 = vadd.f32 0.0, %v1868
        %v1870 = vpop.f32.mrb[0].mxu0
        %1871 = vmatprep.mubr.f32.mxu0 0.0
        %1872 = vmatmul.mubr.f32.gmra.mrb[0].mxu0 %v1735
        %v1873 = vpop.f32.mrb[0].mxu0
        %v1874 = vadd.f32 0.0, %v1873
        %v1875 = vpop.f32.mrb[0].mxu0
        %1876 = vmatprep.mubr.f32.mxu0 0.0
        %1877 = vmatmul.mubr.f32.gmra.mrb[0].mxu0 %v1738
        %v1878 = vpop.f32.mrb[0].mxu0
        %v1879 = vadd.f32 0.0, %v1878
        %v1880 = vpop.f32.mrb[0].mxu0
        %1881 = vmatprep.mubr.f32.mxu0 0.0
        %1882 = vmatmul.mubr.f32.gmra.mrb[0].mxu0 %v1741
        %v1883 = vpop.f32.mrb[0].mxu0
        %v1884 = vadd.f32 0.0, %v1883
        %v1885 = vpop.f32.mrb[0].mxu0
        %1886 = vmatprep.mubr.f32.mxu0 0.0
        %1887 = vmatmul.mubr.f32.gmra.mrb[0].mxu0 %v1744
        %v1888 = vpop.f32.mrb[0].mxu0
        %v1889 = vadd.f32 0.0, %v1888
        %v1890 = vpop.f32.mrb[0].mxu0
        %1891 = vmatprep.mubr.f32.mxu0 0.0
        %1892 = vmatmul.mubr.f32.gmra.mrb[0].mxu0 %v1747
        %v1893 = vpop.f32.mrb[0].mxu0
        %v1894 = vadd.f32 0.0, %v1893
        %v1895 = vpop.f32.mrb[0].mxu0
        %1896 = vmatprep.mubr.f32.mxu0 0.0
        %1897 = vmatmul.mubr.f32.gmra.mrb[0].mxu0 %v1750
        %v1898 = vpop.f32.mrb[0].mxu0
        %v1899 = vadd.f32 0.0, %v1898
        %v1900 = vpop.f32.mrb[0].mxu0
        %1901 = vmatprep.mubr.f32.mxu0 0.0
        %1902 = vmatmul.mubr.f32.gmra.mrb[0].mxu0 %v1753
        %v1903 = vpop.f32.mrb[0].mxu0
        %v1904 = vadd.f32 0.0, %v1903
        %v1905 = vpop.f32.mrb[0].mxu0
        %1906 = vmatprep.mubr.f32.mxu0 0.0
        %1907 = vmatmul.mubr.f32.gmra.mrb[0].mxu0 %v1756
        %v1908 = vpop.f32.mrb[0].mxu0
        %v1909 = vadd.f32 0.0, %v1908
        %v1910 = vpop.f32.mrb[0].mxu0
        %1911 = vmatprep.mubr.f32.mxu0 0.0
        %1912 = vmatmul.mubr.f32.gmra.mrb[0].mxu0 %v1759
        %v1913 = vpop.f32.mrb[0].mxu0
        %v1914 = vadd.f32 0.0, %v1913
        %v1915 = vpop.f32.mrb[0].mxu0
        %1916 = vmatprep.mubr.f32.mxu0 0.0
        %1917 = vmatmul.mubr.f32.gmra.mrb[0].mxu0 %v1762
        %v1918 = vpop.f32.mrb[0].mxu0
        %v1919 = vadd.f32 0.0, %v1918
        %v1920 = vpop.f32.mrb[0].mxu0
        %1921 = vdwg.mxu0
        %v1922 = vadd.f32 %v1670, %v1834
        %v1923 = vadd.f32 %v1671, %v1839
        %v1924 = vadd.f32 %v1672, %v1844
        %v1925 = vadd.f32 %v1673, %v1849
        %v1926 = vadd.f32 %v1674, %v1854
        %v1927 = vadd.f32 %v1675, %v1859
        %v1928 = vadd.f32 %v1676, %v1864
        %v1929 = vadd.f32 %v1677, %v1869
        %v1930 = vadd.f32 %v1678, %v1874
        %v1931 = vadd.f32 %v1679, %v1879
        %v1932 = vadd.f32 %v1680, %v1884
        %v1933 = vadd.f32 %v1681, %v1889
        %v1934 = vadd.f32 %v1682, %v1894
        %v1935 = vadd.f32 %v1683, %v1899
        %v1936 = vadd.f32 %v1684, %v1904
        %v1937 = vadd.f32 %v1685, %v1909
        %v1938 = vadd.f32 %v1686, %v1914
        %v1939 = vadd.f32 %v1687, %v1919
        %s1940 = sadd.s32 %s211, 37
        %s1941 = scalar_lea.vmem %s209, %s1940
        %v1942 = vld [vmem:[%s1941] sm:$0xff]
        %v1943 = vld [vmem:[%s1941 + $0x8] sm:$0xff]
        %v1944 = vld [vmem:[%s1941 + $0x10] sm:$0xff]
        %v1945 = vld [vmem:[%s1941 + $0x18] sm:$0xff]
        %v1946 = vld [vmem:[%s1941 + $0x20] sm:$0xff]
        %v1947 = vld [vmem:[%s1941 + $0x28] sm:$0xff]
        %v1948 = vld [vmem:[%s1941 + $0x30] sm:$0xff]
        %v1949 = vld [vmem:[%s1941 + $0x38] sm:$0xff]
        %v1950 = vld [vmem:[%s1941 + $0x40] sm:$0xff]
        %v1951 = vld [vmem:[%s1941 + $0x48] sm:$0xff]
        %v1952 = vld [vmem:[%s1941 + $0x50] sm:$0xff]
        %v1953 = vld [vmem:[%s1941 + $0x58] sm:$0xff]
        %v1954 = vld [vmem:[%s1941 + $0x60] sm:$0xff]
        %v1955 = vld [vmem:[%s1941 + $0x68] sm:$0xff]
        %v1956 = vld [vmem:[%s1941 + $0x70] sm:$0xff]
        %v1957 = vld [vmem:[%s1941 + $0x78] sm:$0xff]
        %v1958 = vld [vmem:[%s1941 + $0x80] sm:$0xff]
        %v1959 = vld [vmem:[%s1941 + $0x88] sm:$0xff]
        %s1960 = scalar_lea.vmem %s1, 28
        %v1961 = vld [vmem:[%s1960] sm:$0xf]
        %v1963 = vsel %vm254, %v1942, 0
        %v1966 = vsel %vm254, %v1943, 0
        %v1969 = vsel %vm254, %v1944, 0
        %v1972 = vsel %vm254, %v1945, 0
        %v1975 = vsel %vm254, %v1946, 0
        %v1978 = vsel %vm254, %v1947, 0
        %v1981 = vsel %vm254, %v1948, 0
        %v1984 = vsel %vm254, %v1949, 0
        %v1987 = vsel %vm254, %v1950, 0
        %v1990 = vsel %vm254, %v1951, 0
        %v1993 = vsel %vm254, %v1952, 0
        %v1996 = vsel %vm254, %v1953, 0
        %v1999 = vsel %vm254, %v1954, 0
        %v2002 = vsel %vm254, %v1955, 0
        %v2005 = vsel %vm254, %v1956, 0
        %v2008 = vsel %vm254, %v1957, 0
        %v2011 = vsel %vm254, %v1958, 0
        %v2014 = vsel %vm254, %v1959, 0
        %v2017 = vsel %vm309, %v1961, 0
        %2019 = vmatprep.subr.mxu0 0.0
        %2020 = vmatpush1.msra.mxu0 %v2017
        %2021 = vmatprep.subr.mxu0 0.0
        %2022 = vmatpush1.msra.mxu0 0.0
        %2023 = vmatprep.subr.mxu0 0.0
        %2024 = vmatpush1.msra.mxu0 0.0
        %2025 = vmatprep.subr.mxu0 0.0
        %2026 = vmatpush1.msra.mxu0 0.0
        %2027 = vmatprep.subr.mxu0 0.0
        %2028 = vmatpush1.msra.mxu0 0.0
        %2029 = vmatprep.subr.mxu0 0.0
        %2030 = vmatpush1.msra.mxu0 0.0
        %2031 = vmatprep.subr.mxu0 0.0
        %2032 = vmatpush1.msra.mxu0 0.0
        %2033 = vmatprep.subr.mxu0 0.0
        %2034 = vmatpush1.msra.mxu0 0.0
        %2035 = vmatprep.subr.mxu0 0.0
        %2036 = vmatpush1.msra.mxu0 0.0
        %2037 = vmatprep.subr.mxu0 0.0
        %2038 = vmatpush1.msra.mxu0 0.0
        %2039 = vmatprep.subr.mxu0 0.0
        %2040 = vmatpush1.msra.mxu0 0.0
        %2041 = vmatprep.subr.mxu0 0.0
        %2042 = vmatpush1.msra.mxu0 0.0
        %2043 = vmatprep.subr.mxu0 0.0
        %2044 = vmatpush1.msra.mxu0 0.0
        %2045 = vmatprep.subr.mxu0 0.0
        %2046 = vmatpush1.msra.mxu0 0.0
        %2047 = vmatprep.subr.mxu0 0.0
        %2048 = vmatpush1.msra.mxu0 0.0
        %2049 = vmatprep.subr.mxu0 0.0
        %2050 = vmatpush1.msra.mxu0 0.0
        %2051 = vmatprep.subr.mxu0 0.0
        %2052 = vmatpush1.msra.mxu0 0.0
        %2053 = vmatprep.subr.mxu0 0.0
        %2054 = vmatpush1.msra.mxu0 0.0
        %2055 = vmatprep.subr.mxu0 0.0
        %2056 = vmatpush1.msra.mxu0 0.0
        %2057 = vmatprep.subr.mxu0 0.0
        %2058 = vmatpush1.msra.mxu0 0.0
        %2059 = vmatprep.subr.mxu0 0.0
        %2060 = vmatpush1.msra.mxu0 0.0
        %2061 = vmatprep.subr.mxu0 0.0
        %2062 = vmatpush1.msra.mxu0 0.0
        %2063 = vmatprep.subr.mxu0 0.0
        %2064 = vmatpush1.msra.mxu0 0.0
        %2065 = vmatprep.subr.mxu0 0.0
        %2066 = vmatpush1.msra.mxu0 0.0
        %2067 = vmatprep.subr.mxu0 0.0
        %2068 = vmatpush1.msra.mxu0 0.0
        %2069 = vmatprep.subr.mxu0 0.0
        %2070 = vmatpush1.msra.mxu0 0.0
        %2071 = vmatprep.subr.mxu0 0.0
        %2072 = vmatpush1.msra.mxu0 0.0
        %2073 = vmatprep.subr.mxu0 0.0
        %2074 = vmatpush1.msra.mxu0 0.0
        %2075 = vmatprep.subr.mxu0 0.0
        %2076 = vmatpush1.msra.mxu0 0.0
        %2077 = vmatprep.subr.mxu0 0.0
        %2078 = vmatpush1.msra.mxu0 0.0
        %2079 = vmatprep.subr.mxu0 0.0
        %2080 = vmatpush1.msra.mxu0 0.0
        %2081 = vmatprep.subr.mxu0 0.0
        %2082 = vmatpush1.msra.mxu0 0.0
        %2083 = vmatprep.mubr.f32.mxu0 0.0
        %2084 = vmatmul.mubr.f32.gmra.mrb[0].mxu0 %v1963
        %v2085 = vpop.f32.mrb[0].mxu0
        %v2086 = vadd.f32 0.0, %v2085
        %v2087 = vpop.f32.mrb[0].mxu0
        %2088 = vmatprep.mubr.f32.mxu0 0.0
        %2089 = vmatmul.mubr.f32.gmra.mrb[0].mxu0 %v1966
        %v2090 = vpop.f32.mrb[0].mxu0
        %v2091 = vadd.f32 0.0, %v2090
        %v2092 = vpop.f32.mrb[0].mxu0
        %2093 = vmatprep.mubr.f32.mxu0 0.0
        %2094 = vmatmul.mubr.f32.gmra.mrb[0].mxu0 %v1969
        %v2095 = vpop.f32.mrb[0].mxu0
        %v2096 = vadd.f32 0.0, %v2095
        %v2097 = vpop.f32.mrb[0].mxu0
        %2098 = vmatprep.mubr.f32.mxu0 0.0
        %2099 = vmatmul.mubr.f32.gmra.mrb[0].mxu0 %v1972
        %v2100 = vpop.f32.mrb[0].mxu0
        %v2101 = vadd.f32 0.0, %v2100
        %v2102 = vpop.f32.mrb[0].mxu0
        %2103 = vmatprep.mubr.f32.mxu0 0.0
        %2104 = vmatmul.mubr.f32.gmra.mrb[0].mxu0 %v1975
        %v2105 = vpop.f32.mrb[0].mxu0
        %v2106 = vadd.f32 0.0, %v2105
        %v2107 = vpop.f32.mrb[0].mxu0
        %2108 = vmatprep.mubr.f32.mxu0 0.0
        %2109 = vmatmul.mubr.f32.gmra.mrb[0].mxu0 %v1978
        %v2110 = vpop.f32.mrb[0].mxu0
        %v2111 = vadd.f32 0.0, %v2110
        %v2112 = vpop.f32.mrb[0].mxu0
        %2113 = vmatprep.mubr.f32.mxu0 0.0
        %2114 = vmatmul.mubr.f32.gmra.mrb[0].mxu0 %v1981
        %v2115 = vpop.f32.mrb[0].mxu0
        %v2116 = vadd.f32 0.0, %v2115
        %v2117 = vpop.f32.mrb[0].mxu0
        %2118 = vmatprep.mubr.f32.mxu0 0.0
        %2119 = vmatmul.mubr.f32.gmra.mrb[0].mxu0 %v1984
        %v2120 = vpop.f32.mrb[0].mxu0
        %v2121 = vadd.f32 0.0, %v2120
        %v2122 = vpop.f32.mrb[0].mxu0
        %2123 = vmatprep.mubr.f32.mxu0 0.0
        %2124 = vmatmul.mubr.f32.gmra.mrb[0].mxu0 %v1987
        %v2125 = vpop.f32.mrb[0].mxu0
        %v2126 = vadd.f32 0.0, %v2125
        %v2127 = vpop.f32.mrb[0].mxu0
        %2128 = vmatprep.mubr.f32.mxu0 0.0
        %2129 = vmatmul.mubr.f32.gmra.mrb[0].mxu0 %v1990
        %v2130 = vpop.f32.mrb[0].mxu0
        %v2131 = vadd.f32 0.0, %v2130
        %v2132 = vpop.f32.mrb[0].mxu0
        %2133 = vmatprep.mubr.f32.mxu0 0.0
        %2134 = vmatmul.mubr.f32.gmra.mrb[0].mxu0 %v1993
        %v2135 = vpop.f32.mrb[0].mxu0
        %v2136 = vadd.f32 0.0, %v2135
        %v2137 = vpop.f32.mrb[0].mxu0
        %2138 = vmatprep.mubr.f32.mxu0 0.0
        %2139 = vmatmul.mubr.f32.gmra.mrb[0].mxu0 %v1996
        %v2140 = vpop.f32.mrb[0].mxu0
        %v2141 = vadd.f32 0.0, %v2140
        %v2142 = vpop.f32.mrb[0].mxu0
        %2143 = vmatprep.mubr.f32.mxu0 0.0
        %2144 = vmatmul.mubr.f32.gmra.mrb[0].mxu0 %v1999
        %v2145 = vpop.f32.mrb[0].mxu0
        %v2146 = vadd.f32 0.0, %v2145
        %v2147 = vpop.f32.mrb[0].mxu0
        %2148 = vmatprep.mubr.f32.mxu0 0.0
        %2149 = vmatmul.mubr.f32.gmra.mrb[0].mxu0 %v2002
        %v2150 = vpop.f32.mrb[0].mxu0
        %v2151 = vadd.f32 0.0, %v2150
        %v2152 = vpop.f32.mrb[0].mxu0
        %2153 = vmatprep.mubr.f32.mxu0 0.0
        %2154 = vmatmul.mubr.f32.gmra.mrb[0].mxu0 %v2005
        %v2155 = vpop.f32.mrb[0].mxu0
        %v2156 = vadd.f32 0.0, %v2155
        %v2157 = vpop.f32.mrb[0].mxu0
        %2158 = vmatprep.mubr.f32.mxu0 0.0
        %2159 = vmatmul.mubr.f32.gmra.mrb[0].mxu0 %v2008
        %v2160 = vpop.f32.mrb[0].mxu0
        %v2161 = vadd.f32 0.0, %v2160
        %v2162 = vpop.f32.mrb[0].mxu0
        %2163 = vmatprep.mubr.f32.mxu0 0.0
        %2164 = vmatmul.mubr.f32.gmra.mrb[0].mxu0 %v2011
        %v2165 = vpop.f32.mrb[0].mxu0
        %v2166 = vadd.f32 0.0, %v2165
        %v2167 = vpop.f32.mrb[0].mxu0
        %2168 = vmatprep.mubr.f32.mxu0 0.0
        %2169 = vmatmul.mubr.f32.gmra.mrb[0].mxu0 %v2014
        %v2170 = vpop.f32.mrb[0].mxu0
        %v2171 = vadd.f32 0.0, %v2170
        %v2172 = vpop.f32.mrb[0].mxu0
        %2173 = vdwg.mxu0
        %v2174 = vadd.f32 %v1922, %v2086
        %v2175 = vadd.f32 %v1923, %v2091
        %v2176 = vadd.f32 %v1924, %v2096
        %v2177 = vadd.f32 %v1925, %v2101
        %v2178 = vadd.f32 %v1926, %v2106
        %v2179 = vadd.f32 %v1927, %v2111
        %v2180 = vadd.f32 %v1928, %v2116
        %v2181 = vadd.f32 %v1929, %v2121
        %v2182 = vadd.f32 %v1930, %v2126
        %v2183 = vadd.f32 %v1931, %v2131
        %v2184 = vadd.f32 %v1932, %v2136
        %v2185 = vadd.f32 %v1933, %v2141
        %v2186 = vadd.f32 %v1934, %v2146
        %v2187 = vadd.f32 %v1935, %v2151
        %v2188 = vadd.f32 %v1936, %v2156
        %v2189 = vadd.f32 %v1937, %v2161
        %v2190 = vadd.f32 %v1938, %v2166
        %v2191 = vadd.f32 %v1939, %v2171
        %s2192 = sadd.s32 %s211, 38
        %s2193 = scalar_lea.vmem %s209, %s2192
        %v2194 = vld [vmem:[%s2193] sm:$0xff]
        %v2195 = vld [vmem:[%s2193 + $0x8] sm:$0xff]
        %v2196 = vld [vmem:[%s2193 + $0x10] sm:$0xff]
        %v2197 = vld [vmem:[%s2193 + $0x18] sm:$0xff]
        %v2198 = vld [vmem:[%s2193 + $0x20] sm:$0xff]
        %v2199 = vld [vmem:[%s2193 + $0x28] sm:$0xff]
        %v2200 = vld [vmem:[%s2193 + $0x30] sm:$0xff]
        %v2201 = vld [vmem:[%s2193 + $0x38] sm:$0xff]
        %v2202 = vld [vmem:[%s2193 + $0x40] sm:$0xff]
        %v2203 = vld [vmem:[%s2193 + $0x48] sm:$0xff]
        %v2204 = vld [vmem:[%s2193 + $0x50] sm:$0xff]
        %v2205 = vld [vmem:[%s2193 + $0x58] sm:$0xff]
        %v2206 = vld [vmem:[%s2193 + $0x60] sm:$0xff]
        %v2207 = vld [vmem:[%s2193 + $0x68] sm:$0xff]
        %v2208 = vld [vmem:[%s2193 + $0x70] sm:$0xff]
        %v2209 = vld [vmem:[%s2193 + $0x78] sm:$0xff]
        %v2210 = vld [vmem:[%s2193 + $0x80] sm:$0xff]
        %v2211 = vld [vmem:[%s2193 + $0x88] sm:$0xff]
        %s2212 = scalar_lea.vmem %s1, 32
        %v2213 = vld [vmem:[%s2212] sm:$0xf]
        %v2215 = vsel %vm254, %v2194, 0
        %v2218 = vsel %vm254, %v2195, 0
        %v2221 = vsel %vm254, %v2196, 0
        %v2224 = vsel %vm254, %v2197, 0
        %v2227 = vsel %vm254, %v2198, 0
        %v2230 = vsel %vm254, %v2199, 0
        %v2233 = vsel %vm254, %v2200, 0
        %v2236 = vsel %vm254, %v2201, 0
        %v2239 = vsel %vm254, %v2202, 0
        %v2242 = vsel %vm254, %v2203, 0
        %v2245 = vsel %vm254, %v2204, 0
        %v2248 = vsel %vm254, %v2205, 0
        %v2251 = vsel %vm254, %v2206, 0
        %v2254 = vsel %vm254, %v2207, 0
        %v2257 = vsel %vm254, %v2208, 0
        %v2260 = vsel %vm254, %v2209, 0
        %v2263 = vsel %vm254, %v2210, 0
        %v2266 = vsel %vm254, %v2211, 0
        %v2269 = vsel %vm309, %v2213, 0
        %2271 = vmatprep.subr.mxu0 0.0
        %2272 = vmatpush1.msra.mxu0 %v2269
        %2273 = vmatprep.subr.mxu0 0.0
        %2274 = vmatpush1.msra.mxu0 0.0
        %2275 = vmatprep.subr.mxu0 0.0
        %2276 = vmatpush1.msra.mxu0 0.0
        %2277 = vmatprep.subr.mxu0 0.0
        %2278 = vmatpush1.msra.mxu0 0.0
        %2279 = vmatprep.subr.mxu0 0.0
        %2280 = vmatpush1.msra.mxu0 0.0
        %2281 = vmatprep.subr.mxu0 0.0
        %2282 = vmatpush1.msra.mxu0 0.0
        %2283 = vmatprep.subr.mxu0 0.0
        %2284 = vmatpush1.msra.mxu0 0.0
        %2285 = vmatprep.subr.mxu0 0.0
        %2286 = vmatpush1.msra.mxu0 0.0
        %2287 = vmatprep.subr.mxu0 0.0
        %2288 = vmatpush1.msra.mxu0 0.0
        %2289 = vmatprep.subr.mxu0 0.0
        %2290 = vmatpush1.msra.mxu0 0.0
        %2291 = vmatprep.subr.mxu0 0.0
        %2292 = vmatpush1.msra.mxu0 0.0
        %2293 = vmatprep.subr.mxu0 0.0
        %2294 = vmatpush1.msra.mxu0 0.0
        %2295 = vmatprep.subr.mxu0 0.0
        %2296 = vmatpush1.msra.mxu0 0.0
        %2297 = vmatprep.subr.mxu0 0.0
        %2298 = vmatpush1.msra.mxu0 0.0
        %2299 = vmatprep.subr.mxu0 0.0
        %2300 = vmatpush1.msra.mxu0 0.0
        %2301 = vmatprep.subr.mxu0 0.0
        %2302 = vmatpush1.msra.mxu0 0.0
        %2303 = vmatprep.subr.mxu0 0.0
        %2304 = vmatpush1.msra.mxu0 0.0
        %2305 = vmatprep.subr.mxu0 0.0
        %2306 = vmatpush1.msra.mxu0 0.0
        %2307 = vmatprep.subr.mxu0 0.0
        %2308 = vmatpush1.msra.mxu0 0.0
        %2309 = vmatprep.subr.mxu0 0.0
        %2310 = vmatpush1.msra.mxu0 0.0
        %2311 = vmatprep.subr.mxu0 0.0
        %2312 = vmatpush1.msra.mxu0 0.0
        %2313 = vmatprep.subr.mxu0 0.0
        %2314 = vmatpush1.msra.mxu0 0.0
        %2315 = vmatprep.subr.mxu0 0.0
        %2316 = vmatpush1.msra.mxu0 0.0
        %2317 = vmatprep.subr.mxu0 0.0
        %2318 = vmatpush1.msra.mxu0 0.0
        %2319 = vmatprep.subr.mxu0 0.0
        %2320 = vmatpush1.msra.mxu0 0.0
        %2321 = vmatprep.subr.mxu0 0.0
        %2322 = vmatpush1.msra.mxu0 0.0
        %2323 = vmatprep.subr.mxu0 0.0
        %2324 = vmatpush1.msra.mxu0 0.0
        %2325 = vmatprep.subr.mxu0 0.0
        %2326 = vmatpush1.msra.mxu0 0.0
        %2327 = vmatprep.subr.mxu0 0.0
        %2328 = vmatpush1.msra.mxu0 0.0
        %2329 = vmatprep.subr.mxu0 0.0
        %2330 = vmatpush1.msra.mxu0 0.0
        %2331 = vmatprep.subr.mxu0 0.0
        %2332 = vmatpush1.msra.mxu0 0.0
        %2333 = vmatprep.subr.mxu0 0.0
        %2334 = vmatpush1.msra.mxu0 0.0
        %2335 = vmatprep.mubr.f32.mxu0 0.0
        %2336 = vmatmul.mubr.f32.gmra.mrb[0].mxu0 %v2215
        %v2337 = vpop.f32.mrb[0].mxu0
        %v2338 = vadd.f32 0.0, %v2337
        %v2339 = vpop.f32.mrb[0].mxu0
        %2340 = vmatprep.mubr.f32.mxu0 0.0
        %2341 = vmatmul.mubr.f32.gmra.mrb[0].mxu0 %v2218
        %v2342 = vpop.f32.mrb[0].mxu0
        %v2343 = vadd.f32 0.0, %v2342
        %v2344 = vpop.f32.mrb[0].mxu0
        %2345 = vmatprep.mubr.f32.mxu0 0.0
        %2346 = vmatmul.mubr.f32.gmra.mrb[0].mxu0 %v2221
        %v2347 = vpop.f32.mrb[0].mxu0
        %v2348 = vadd.f32 0.0, %v2347
        %v2349 = vpop.f32.mrb[0].mxu0
        %2350 = vmatprep.mubr.f32.mxu0 0.0
        %2351 = vmatmul.mubr.f32.gmra.mrb[0].mxu0 %v2224
        %v2352 = vpop.f32.mrb[0].mxu0
        %v2353 = vadd.f32 0.0, %v2352
        %v2354 = vpop.f32.mrb[0].mxu0
        %2355 = vmatprep.mubr.f32.mxu0 0.0
        %2356 = vmatmul.mubr.f32.gmra.mrb[0].mxu0 %v2227
        %v2357 = vpop.f32.mrb[0].mxu0
        %v2358 = vadd.f32 0.0, %v2357
        %v2359 = vpop.f32.mrb[0].mxu0
        %2360 = vmatprep.mubr.f32.mxu0 0.0
        %2361 = vmatmul.mubr.f32.gmra.mrb[0].mxu0 %v2230
        %v2362 = vpop.f32.mrb[0].mxu0
        %v2363 = vadd.f32 0.0, %v2362
        %v2364 = vpop.f32.mrb[0].mxu0
        %2365 = vmatprep.mubr.f32.mxu0 0.0
        %2366 = vmatmul.mubr.f32.gmra.mrb[0].mxu0 %v2233
        %v2367 = vpop.f32.mrb[0].mxu0
        %v2368 = vadd.f32 0.0, %v2367
        %v2369 = vpop.f32.mrb[0].mxu0
        %2370 = vmatprep.mubr.f32.mxu0 0.0
        %2371 = vmatmul.mubr.f32.gmra.mrb[0].mxu0 %v2236
        %v2372 = vpop.f32.mrb[0].mxu0
        %v2373 = vadd.f32 0.0, %v2372
        %v2374 = vpop.f32.mrb[0].mxu0
        %2375 = vmatprep.mubr.f32.mxu0 0.0
        %2376 = vmatmul.mubr.f32.gmra.mrb[0].mxu0 %v2239
        %v2377 = vpop.f32.mrb[0].mxu0
        %v2378 = vadd.f32 0.0, %v2377
        %v2379 = vpop.f32.mrb[0].mxu0
        %2380 = vmatprep.mubr.f32.mxu0 0.0
        %2381 = vmatmul.mubr.f32.gmra.mrb[0].mxu0 %v2242
        %v2382 = vpop.f32.mrb[0].mxu0
        %v2383 = vadd.f32 0.0, %v2382
        %v2384 = vpop.f32.mrb[0].mxu0
        %2385 = vmatprep.mubr.f32.mxu0 0.0
        %2386 = vmatmul.mubr.f32.gmra.mrb[0].mxu0 %v2245
        %v2387 = vpop.f32.mrb[0].mxu0
        %v2388 = vadd.f32 0.0, %v2387
        %v2389 = vpop.f32.mrb[0].mxu0
        %2390 = vmatprep.mubr.f32.mxu0 0.0
        %2391 = vmatmul.mubr.f32.gmra.mrb[0].mxu0 %v2248
        %v2392 = vpop.f32.mrb[0].mxu0
        %v2393 = vadd.f32 0.0, %v2392
        %v2394 = vpop.f32.mrb[0].mxu0
        %2395 = vmatprep.mubr.f32.mxu0 0.0
        %2396 = vmatmul.mubr.f32.gmra.mrb[0].mxu0 %v2251
        %v2397 = vpop.f32.mrb[0].mxu0
        %v2398 = vadd.f32 0.0, %v2397
        %v2399 = vpop.f32.mrb[0].mxu0
        %2400 = vmatprep.mubr.f32.mxu0 0.0
        %2401 = vmatmul.mubr.f32.gmra.mrb[0].mxu0 %v2254
        %v2402 = vpop.f32.mrb[0].mxu0
        %v2403 = vadd.f32 0.0, %v2402
        %v2404 = vpop.f32.mrb[0].mxu0
        %2405 = vmatprep.mubr.f32.mxu0 0.0
        %2406 = vmatmul.mubr.f32.gmra.mrb[0].mxu0 %v2257
        %v2407 = vpop.f32.mrb[0].mxu0
        %v2408 = vadd.f32 0.0, %v2407
        %v2409 = vpop.f32.mrb[0].mxu0
        %2410 = vmatprep.mubr.f32.mxu0 0.0
        %2411 = vmatmul.mubr.f32.gmra.mrb[0].mxu0 %v2260
        %v2412 = vpop.f32.mrb[0].mxu0
        %v2413 = vadd.f32 0.0, %v2412
        %v2414 = vpop.f32.mrb[0].mxu0
        %2415 = vmatprep.mubr.f32.mxu0 0.0
        %2416 = vmatmul.mubr.f32.gmra.mrb[0].mxu0 %v2263
        %v2417 = vpop.f32.mrb[0].mxu0
        %v2418 = vadd.f32 0.0, %v2417
        %v2419 = vpop.f32.mrb[0].mxu0
        %2420 = vmatprep.mubr.f32.mxu0 0.0
        %2421 = vmatmul.mubr.f32.gmra.mrb[0].mxu0 %v2266
        %v2422 = vpop.f32.mrb[0].mxu0
        %v2423 = vadd.f32 0.0, %v2422
        %v2424 = vpop.f32.mrb[0].mxu0
        %2425 = vdwg.mxu0
        %v2426 = vadd.f32 %v2174, %v2338
        %v2427 = vadd.f32 %v2175, %v2343
        %v2428 = vadd.f32 %v2176, %v2348
        %v2429 = vadd.f32 %v2177, %v2353
        %v2430 = vadd.f32 %v2178, %v2358
        %v2431 = vadd.f32 %v2179, %v2363
        %v2432 = vadd.f32 %v2180, %v2368
        %v2433 = vadd.f32 %v2181, %v2373
        %v2434 = vadd.f32 %v2182, %v2378
        %v2435 = vadd.f32 %v2183, %v2383
        %v2436 = vadd.f32 %v2184, %v2388
        %v2437 = vadd.f32 %v2185, %v2393
        %v2438 = vadd.f32 %v2186, %v2398
        %v2439 = vadd.f32 %v2187, %v2403
        %v2440 = vadd.f32 %v2188, %v2408
        %v2441 = vadd.f32 %v2189, %v2413
        %v2442 = vadd.f32 %v2190, %v2418
        %v2443 = vadd.f32 %v2191, %v2423
        %v2444 = vld [vmem:[%s3] sm:$0x1]
        %v2446 = vlaneseq
        %v2447 = vshrl.u32 %v2446, 7
        %v2448 = vsub.s32 0, %v2447
        %v2449 = vrot.slane %v2444, %v2448
        %v2451 = vadd.f32 %v2426, %v2449
        %v2452 = vadd.f32 %v2427, %v2449
        %v2453 = vadd.f32 %v2428, %v2449
        %v2454 = vadd.f32 %v2429, %v2449
        %v2455 = vadd.f32 %v2430, %v2449
        %v2456 = vadd.f32 %v2431, %v2449
        %v2457 = vadd.f32 %v2432, %v2449
        %v2458 = vadd.f32 %v2433, %v2449
        %v2459 = vadd.f32 %v2434, %v2449
        %v2460 = vadd.f32 %v2435, %v2449
        %v2461 = vadd.f32 %v2436, %v2449
        %v2462 = vadd.f32 %v2437, %v2449
        %v2463 = vadd.f32 %v2438, %v2449
        %v2464 = vadd.f32 %v2439, %v2449
        %v2465 = vadd.f32 %v2440, %v2449
        %v2466 = vadd.f32 %v2441, %v2449
        %v2467 = vadd.f32 %v2442, %v2449
        %v2468 = vadd.f32 %v2443, %v2449
        %v2469 = vmax.f32 %v2451, 0.0
        %v2470 = vmax.f32 %v2452, 0.0
        %v2471 = vmax.f32 %v2453, 0.0
        %v2472 = vmax.f32 %v2454, 0.0
        %v2473 = vmax.f32 %v2455, 0.0
        %v2474 = vmax.f32 %v2456, 0.0
        %v2475 = vmax.f32 %v2457, 0.0
        %v2476 = vmax.f32 %v2458, 0.0
        %v2477 = vmax.f32 %v2459, 0.0
        %v2478 = vmax.f32 %v2460, 0.0
        %v2479 = vmax.f32 %v2461, 0.0
        %v2480 = vmax.f32 %v2462, 0.0
        %v2481 = vmax.f32 %v2463, 0.0
        %v2482 = vmax.f32 %v2464, 0.0
        %v2483 = vmax.f32 %v2465, 0.0
        %v2484 = vmax.f32 %v2466, 0.0
        %v2485 = vmax.f32 %v2467, 0.0
        %v2486 = vmax.f32 %v2468, 0.0
        %2487 = vst [vmem:[%s204] sm:$0xff] %v2469
        %2488 = vst [vmem:[%s204 + $0x8] sm:$0xff] %v2470
        %2489 = vst [vmem:[%s204 + $0x10] sm:$0xff] %v2471
        %2490 = vst [vmem:[%s204 + $0x18] sm:$0xff] %v2472
        %2491 = vst [vmem:[%s204 + $0x20] sm:$0xff] %v2473
        %2492 = vst [vmem:[%s204 + $0x28] sm:$0xff] %v2474
        %2493 = vst [vmem:[%s204 + $0x30] sm:$0xff] %v2475
        %2494 = vst [vmem:[%s204 + $0x38] sm:$0xff] %v2476
        %2495 = vst [vmem:[%s204 + $0x40] sm:$0xff] %v2477
        %2496 = vst [vmem:[%s204 + $0x48] sm:$0xff] %v2478
        %2497 = vst [vmem:[%s204 + $0x50] sm:$0xff] %v2479
        %2498 = vst [vmem:[%s204 + $0x58] sm:$0xff] %v2480
        %2499 = vst [vmem:[%s204 + $0x60] sm:$0xff] %v2481
        %2500 = vst [vmem:[%s204 + $0x68] sm:$0xff] %v2482
        %2501 = vst [vmem:[%s204 + $0x70] sm:$0xff] %v2483
        %2502 = vst [vmem:[%s204 + $0x78] sm:$0xff] %v2484
        %2503 = vst [vmem:[%s204 + $0x80] sm:$0xff] %v2485
        %2504 = vst [vmem:[%s204 + $0x88] sm:$0xff] %v2486
        %s2505 = sand.u32 %s129, 1
        %s2506 = scalar_lea.sflag [#allocation3], %s2505
        %s2507 = sand.u32 %s129, 1
        %s2508 = smul.addr %s2507, 144
        %s2509 = scalar_lea.vmem [#allocation2], %s2508
        // Predicated region
        $region37: #{tpu_custom_call.1} parent=35 // pred_check
          %p2510 = pneg %p139
        $region38: #{tpu_custom_call.1} parent=35 // pred_check_branch
          %2512 = sbr.rel (%p2510) target = $region40
        $region39: #{tpu_custom_call.1} parent=35 // pred_region
          %s2513 = smul.u32 18, %s23
          %s2515 = ssub.s32 2304, 2304
          %2516 = vsyncadd %s2506, %s2515
          %s2517 = smul.addr %s22, 36
          %s2518 = sadd.s32 %s2513, %s2517
          %s2519 = smul.addr %s2518, 128
          %s2520 = scalar_lea.hbm %s4, %s2519
          %s2521 = sshll.u32 %s2509, 4
          %s2522 = int_to_ptr.vmem [resolvable:$true] %s2521
          %2527 = dma.vmem_to_hbm [thread:$0]  %s2522, 2304, %s2520, %s2506, 128, 128, 8
        $region40: #{tpu_custom_call.1} parent=35 // pred_fallthru
          _
      $region36: #{tpu_custom_call.1} parent=5 // pred_fallthru
        _
      %p2528 = scmp.le.s32.totalorder 2, %s13
      // Predicated region
      $region41: #{tpu_custom_call.1} parent=5 // pred_check
        %p2529 = pneg %p2528
      $region42: #{tpu_custom_call.1} parent=5 // pred_check_branch
        %2531 = sbr.rel (%p2529) target = $region44
      $region43: #{tpu_custom_call.1} parent=5 // pred_region
        %s2532 = ssub.s32 %s13, 2
        // Predicated region
        $region45: #{tpu_custom_call.1} parent=43 // pred_check
          %p2533 = pneg %p145
        $region46: #{tpu_custom_call.1} parent=43 // pred_check_branch
          %2535 = sbr.rel (%p2533) target = $region48
        $region47: #{tpu_custom_call.1} parent=43 // pred_region
          %s2536 = sand.u32 %s130, 1
          %s2537 = scalar_lea.sflag [#allocation3], %s2536
          %s2538 = sand.u32 %s130, 1
          %s2539 = smul.addr %s2538, 144
          %s2540 = scalar_lea.vmem [#allocation2], %s2539
          %2541 = dma.done %s2537, 2304
        $region48: #{tpu_custom_call.1} parent=43 // pred_fallthru
          _
      $region44: #{tpu_custom_call.1} parent=5 // pred_fallthru
        _
    $region6: #{tpu_custom_call.1} parent=1 // loop_footer
      %s17 = sadd.s32 1, %s13
    $region7: #{tpu_custom_call.1} parent=1 // loop_footer_branch
      %12 = sbr.rel target = $region3
    $region8: #{tpu_custom_call.1} parent=1 // loop_exit
      _
    %2542 = vsyncpa [#allocation3], 1
    %s2543 = scalar_lea.sflag [#allocation3], 1
    %2544 = vsyncpa %s2543, 1

</llo_original>
